<compile_context>
chip_gen: v5e
topology: v5e:2x2
jax: 0.10.0
libtpu: 0.0.40
codegen_flags: <defaults>
</compile_context>

<pallas_src>
import functools

import jax
import jax.numpy as jnp
from jax.experimental import pallas as pl
from jax.experimental.pallas import tpu as pltpu


def _round_up(x, m):
    return ((x + m - 1) // m) * m


def _pick_divisor_tile(total, cap, quantum):
    """Largest multiple of `quantum` that divides `total` and is <= cap.
    `total` is assumed to be a positive multiple of `quantum`."""
    best = quantum
    t = quantum
    while t <= min(total, cap):
        if total % t == 0:
            best = t
        t += quantum
    return best


# ----------------------------------------------------------------------------
# Pallas kernels
# ----------------------------------------------------------------------------
def _matmul_stats_kernel(x_ref, w_ref, y_ref, s_ref, ss_ref, acc_ref):
    """Tiled matmul (bf16 operands, f32 accumulation).  At the last K step the
    epilogue also emits the per-tile per-channel sum and sum-of-squares, fusing
    the BatchNorm reduction into the conv kernel."""
    k = pl.program_id(1)

    @pl.when(k == 0)
    def _init():
        acc_ref[...] = jnp.zeros_like(acc_ref)

    acc_ref[...] += jnp.dot(
        x_ref[...], w_ref[...], preferred_element_type=jnp.float32
    )

    @pl.when(k == pl.num_programs(1) - 1)
    def _finalize():
        acc = acc_ref[...]
        y_ref[...] = acc
        s_ref[...] = jnp.sum(acc, axis=0, keepdims=True)[None]
        ss_ref[...] = jnp.sum(acc * acc, axis=0, keepdims=True)[None]


def _scale_shift_act_kernel(x_ref, sc_ref, sh_ref, o_ref, *, relu):
    """y = x * scale + shift  (optionally ReLU); scale/shift are (1, C)."""
    y = x_ref[...] * sc_ref[...] + sh_ref[...]
    if relu:
        y = jnp.maximum(y, 0.0)
    o_ref[...] = y.astype(o_ref.dtype)


def _scale_shift_add_relu_kernel(x_ref, r_ref, sc_ref, sh_ref, o_ref):
    """y = relu(x * scale + shift + residual)."""
    y = x_ref[...] * sc_ref[...] + sh_ref[...] + r_ref[...]
    o_ref[...] = jnp.maximum(y, 0.0).astype(o_ref.dtype)


# ----------------------------------------------------------------------------
# Conv 3x3 (stride 1, pad 1, bias=False) + fused batch statistics
# ----------------------------------------------------------------------------
def _im2col_3x3(x_nhwc):
    # TODO(synk): fold the 9 (kh, kw) taps into the matmul grid (shifted-window
    # DMA from the padded NHWC input) to avoid materializing the 9x im2col
    # patch matrix in HBM for large images; BlockSpec cannot express the
    # overlapping shifted windows directly, so this stays XLA glue for now.
    N, H, W, C = x_nhwc.shape
    xp = jnp.pad(x_nhwc, ((0, 0), (1, 1), (1, 1), (0, 0)))
    cols = []
    for kh in range(3):
        for kw in range(3):
            cols.append(xp[:, kh:kh + H, kw:kw + W, :])
    patches = jnp.concatenate(cols, axis=-1).reshape(N * H * W, 9 * C)
    return patches, (N, H, W)


def conv3x3_batch_stats(x_nhwc, w_oihw, *, tm, mpad, cpad, tk_cap=1024):
    """Returns raw conv output as a lane-dense (mpad, cpad) f32 matrix plus the
    per-channel batch mean and biased variance over the valid rows."""
    patches, dims = _im2col_3x3(x_nhwc)
    M, K = patches.shape
    Cout = w_oihw.shape[0]
    assert M <= mpad and Cout <= cpad

    kpad = _round_up(K, 128)
    tk = _pick_divisor_tile(kpad, tk_cap, 128)

    # bf16 MXU operands; zero padding keeps padded rows / channels exactly 0.
    xp2d = jnp.pad(patches, ((0, mpad - M), (0, kpad - K))).astype(jnp.bfloat16)
    w2d = jnp.transpose(w_oihw, (2, 3, 1, 0)).reshape(K, Cout)
    w2d = jnp.pad(w2d, ((0, kpad - K), (0, cpad - Cout))).astype(jnp.bfloat16)

    m_tiles = mpad // tm
    k_tiles = kpad // tk

    cost = pl.CostEstimate(
        flops=2 * mpad * kpad * cpad,
        transcendentals=0,
        bytes_accessed=int(xp2d.size) * 2 + int(w2d.size) * 2 + mpad * cpad * 4,
    )

    y, s, ss = pl.pallas_call(
        _matmul_stats_kernel,
        grid=(m_tiles, k_tiles),
        in_specs=[
            pl.BlockSpec((tm, tk), lambda i, k: (i, k)),
            pl.BlockSpec((tk, cpad), lambda i, k: (k, 0)),
        ],
        out_specs=(
            pl.BlockSpec((tm, cpad), lambda i, k: (i, 0)),
            pl.BlockSpec((1, 1, cpad), lambda i, k: (i, 0, 0)),
            pl.BlockSpec((1, 1, cpad), lambda i, k: (i, 0, 0)),
        ),
        out_shape=(
            jax.ShapeDtypeStruct((mpad, cpad), jnp.float32),
            jax.ShapeDtypeStruct((m_tiles, 1, cpad), jnp.float32),
            jax.ShapeDtypeStruct((m_tiles, 1, cpad), jnp.float32),
        ),
        scratch_shapes=[pltpu.VMEM((tm, cpad), jnp.float32)],
        compiler_params=pltpu.CompilerParams(
            dimension_semantics=("parallel", "arbitrary")
        ),
        cost_estimate=cost,
    )(xp2d, w2d)

    # Tiny (m_tiles, cpad) reduction; padded rows are exactly zero, so dividing
    # by the true row count M gives PyTorch training-mode batch statistics.
    total = jnp.sum(s[:, 0, :], axis=0)
    total_sq = jnp.sum(ss[:, 0, :], axis=0)
    mean = total / M
    var = total_sq / M - mean * mean          # biased variance (BN training mode)
    return y, mean, var, dims


# ----------------------------------------------------------------------------
# Tiled elementwise BN-affine kernels
# ----------------------------------------------------------------------------
def bn_scale_shift(mean, var, gamma, beta, eps=1e-5):
    scale = gamma * jax.lax.rsqrt(var + eps)
    shift = beta - mean * scale
    return (scale.reshape(1, -1).astype(jnp.float32),
            shift.reshape(1, -1).astype(jnp.float32))


def apply_scale_shift_act(y2d, scale, shift, *, relu, out_dtype, tm):
    mpad, cpad = y2d.shape
    m_tiles = mpad // tm
    return pl.pallas_call(
        functools.partial(_scale_shift_act_kernel, relu=relu),
        grid=(m_tiles,),
        in_specs=[
            pl.BlockSpec((tm, cpad), lambda i: (i, 0)),
            pl.BlockSpec((1, cpad), lambda i: (0, 0)),
            pl.BlockSpec((1, cpad), lambda i: (0, 0)),
        ],
        out_specs=pl.BlockSpec((tm, cpad), lambda i: (i, 0)),
        out_shape=jax.ShapeDtypeStruct((mpad, cpad), out_dtype),
        compiler_params=pltpu.CompilerParams(dimension_semantics=("parallel",)),
    )(y2d, scale, shift)


def apply_scale_shift_add_relu(y2d, res2d, scale, shift, *, tm):
    mpad, cpad = y2d.shape
    m_tiles = mpad // tm
    return pl.pallas_call(
        _scale_shift_add_relu_kernel,
        grid=(m_tiles,),
        in_specs=[
            pl.BlockSpec((tm, cpad), lambda i: (i, 0)),
            pl.BlockSpec((tm, cpad), lambda i: (i, 0)),
            pl.BlockSpec((1, cpad), lambda i: (0, 0)),
            pl.BlockSpec((1, cpad), lambda i: (0, 0)),
        ],
        out_specs=pl.BlockSpec((tm, cpad), lambda i: (i, 0)),
        out_shape=jax.ShapeDtypeStruct((mpad, cpad), jnp.float32),
        compiler_params=pltpu.CompilerParams(dimension_semantics=("parallel",)),
    )(y2d, res2d, scale, shift)


# ----------------------------------------------------------------------------
# residualBlock: parameters + forward
# ----------------------------------------------------------------------------
def make_residual_block_params(key, in_channels, n_filters):
    k1, k2, k3, k4, k5, k6 = jax.random.split(key, 6)
    fan1 = 9 * in_channels
    fan2 = 9 * n_filters
    return dict(
        w1=jax.random.normal(k1, (n_filters, in_channels, 3, 3), jnp.float32) * (2.0 / fan1) ** 0.5,
        g1=1.0 + 0.1 * jax.random.normal(k2, (n_filters,), jnp.float32),
        b1=0.1 * jax.random.normal(k3, (n_filters,), jnp.float32),
        w2=jax.random.normal(k4, (n_filters, n_filters, 3, 3), jnp.float32) * (2.0 / fan2) ** 0.5,
        g2=1.0 + 0.1 * jax.random.normal(k5, (n_filters,), jnp.float32),
        b2=0.1 * jax.random.normal(k6, (n_filters,), jnp.float32),
    )


def residual_block_forward(params, x_nchw, *, tm_cap=512):
    x = jnp.transpose(x_nchw, (0, 2, 3, 1)).astype(jnp.float32)   # NCHW -> NHWC
    N, H, W, C = x.shape
    Cf = params["w1"].shape[0]
    assert params["w1"].shape[1] == C and Cf == C, \
        "downsample=None requires n_filters == in_channels, stride == 1"

    M = N * H * W
    tm = min(tm_cap, _round_up(M, 8))          # big row tiles, sublane-aligned
    mpad = _round_up(M, tm)
    cpad = _round_up(Cf, 128)                  # lane-dense output channels

    def pad_vec(v, fill):
        return jnp.pad(v.astype(jnp.float32), (0, cpad - v.shape[0]),
                       constant_values=fill)

    # --- convbnrelu1: Conv(3x3,s1,p1,bias=False) -> BN(batch stats) -> ReLU
    y1_raw, mean1, var1, _ = conv3x3_batch_stats(
        x, params["w1"], tm=tm, mpad=mpad, cpad=cpad)
    sc1, sh1 = bn_scale_shift(mean1, var1,
                              pad_vec(params["g1"], 1.0), pad_vec(params["b1"], 0.0))
    y1 = apply_scale_shift_act(y1_raw, sc1, sh1, relu=True,
                               out_dtype=jnp.bfloat16, tm=tm)
    y1_nhwc = y1[:M, :Cf].reshape(N, H, W, Cf)

    # --- convbn2: Conv(3x3,s1,p1,bias=False) -> BN(batch stats)
    y2_raw, mean2, var2, _ = conv3x3_batch_stats(
        y1_nhwc, params["w2"], tm=tm, mpad=mpad, cpad=cpad)
    sc2, sh2 = bn_scale_shift(mean2, var2,
                              pad_vec(params["g2"], 1.0), pad_vec(params["b2"], 0.0))

    # --- out = relu(BN2(conv2(...)) + residual)
    res2d = jnp.pad(x.reshape(M, C), ((0, mpad - M), (0, cpad - C)))
    out2d = apply_scale_shift_add_relu(y2_raw, res2d, sc2, sh2, tm=tm)

    out = out2d[:M, :Cf].reshape(N, H, W, Cf)
    return jnp.transpose(out, (0, 3, 1, 2))                      # NHWC -> NCHW


# ----------------------------------------------------------------------------
if __name__ == "__main__":
    batch, channels, spatial = 2, 4, 16                          # n_filters == in_channels

    key = jax.random.PRNGKey(0)
    kp, kx = jax.random.split(key)
    params = make_residual_block_params(kp, channels, channels)
    x = jax.random.normal(kx, (batch, channels, spatial, spatial), jnp.float32)

    fwd = jax.jit(lambda inp: residual_block_forward(params, inp))
    out = jax.block_until_ready(fwd(x))

    assert out.shape == (batch, channels, spatial, spatial), out.shape
    assert bool(jnp.all(jnp.isfinite(out)))
    assert bool(jnp.all(out >= 0.0))                              # final ReLU
    print("KERNEL_OK")
</pallas_src>

<mosaic_0001>
module attributes {stable_mosaic.version = 11 : i64} {
  func.func @_matmul_stats_kernel(%arg0: i32, %arg1: i32, %arg2: memref<512x128xbf16, #tpu.memory_space<vmem>>, %arg3: memref<128x128xbf16, #tpu.memory_space<vmem>>, %arg4: memref<512x128xf32, #tpu.memory_space<vmem>>, %arg5: memref<1x1x128xf32, #tpu.memory_space<vmem>>, %arg6: memref<1x1x128xf32, #tpu.memory_space<vmem>>, %arg7: memref<512x128xf32, #tpu.memory_space<vmem>>) attributes {dimension_semantics = [#tpu.dimension_semantics<parallel>, #tpu.dimension_semantics<arbitrary>], iteration_bounds = array<i64: 1, 1>, scalar_prefetch = 0 : i64, scratch_operands = 1 : i64, tpu.core_type = #tpu.core_type<tc>, window_params = [{transform_indices = @transform_0, window_bounds = array<i64: 512, 128>}, {transform_indices = @transform_1, window_bounds = array<i64: 128, 128>}, {transform_indices = @transform_2, window_bounds = array<i64: 512, 128>}, {transform_indices = @transform_3, window_bounds = array<i64: 1, 1, 128>}, {transform_indices = @transform_4, window_bounds = array<i64: 1, 1, 128>}]} {
    %c0_i32 = arith.constant 0 : i32
    %0 = arith.cmpi eq, %arg1, %c0_i32 : i32
    %1 = arith.extui %0 : i1 to i32
    %c0_i32_0 = arith.constant 0 : i32
    %2 = arith.cmpi ne, %1, %c0_i32_0 : i32
    scf.if %2 {
      %cst_10 = arith.constant 0.000000e+00 : f32
      %12 = vector.broadcast %cst_10 : f32 to vector<512x128xf32>
      %c0_11 = arith.constant 0 : index
      %c0_12 = arith.constant 0 : index
      %13 = vector.load %arg7[%c0_11, %c0_12] : memref<512x128xf32, #tpu.memory_space<vmem>>, vector<512x128xf32>
      tpu.vector_store %arg7[%c0_11, %c0_12], %12 {strides = array<i32>} : memref<512x128xf32, #tpu.memory_space<vmem>>, vector<512x128xf32>,
    } else {
    }
    %c0 = arith.constant 0 : index
    %c0_1 = arith.constant 0 : index
    %3 = vector.load %arg7[%c0, %c0_1] : memref<512x128xf32, #tpu.memory_space<vmem>>, vector<512x128xf32>
    %c0_2 = arith.constant 0 : index
    %c0_3 = arith.constant 0 : index
    %4 = vector.load %arg2[%c0_2, %c0_3] : memref<512x128xbf16, #tpu.memory_space<vmem>>, vector<512x128xbf16>
    %c0_4 = arith.constant 0 : index
    %c0_5 = arith.constant 0 : index
    %5 = vector.load %arg3[%c0_4, %c0_5] : memref<128x128xbf16, #tpu.memory_space<vmem>>, vector<128x128xbf16>
    %cst = arith.constant dense<0.000000e+00> : vector<512x128xf32>
    %6 = tpu.matmul %4, %5, %cst {dimension_numbers = #tpu.dot_dimension_numbers<[1], [0], [0], [1], [0, 0, 1, 1], [], []>} : vector<512x128xbf16>, vector<128x128xbf16>, vector<512x128xf32> -> vector<512x128xf32>
    %7 = arith.addf %3, %6 : vector<512x128xf32>
    %c0_6 = arith.constant 0 : index
    %c0_7 = arith.constant 0 : index
    %8 = vector.load %arg7[%c0_6, %c0_7] : memref<512x128xf32, #tpu.memory_space<vmem>>, vector<512x128xf32>
    tpu.vector_store %arg7[%c0_6, %c0_7], %7 {strides = array<i32>} : memref<512x128xf32, #tpu.memory_space<vmem>>, vector<512x128xf32>,
    %c0_i32_8 = arith.constant 0 : i32
    %9 = arith.cmpi eq, %arg1, %c0_i32_8 : i32
    %10 = arith.extui %9 : i1 to i32
    %c0_i32_9 = arith.constant 0 : i32
    %11 = arith.cmpi ne, %10, %c0_i32_9 : i32
    scf.if %11 {
      %c0_10 = arith.constant 0 : index
      %c0_11 = arith.constant 0 : index
      %12 = vector.load %arg7[%c0_10, %c0_11] : memref<512x128xf32, #tpu.memory_space<vmem>>, vector<512x128xf32>
      %c0_12 = arith.constant 0 : index
      %c0_13 = arith.constant 0 : index
      %13 = vector.load %arg4[%c0_12, %c0_13] : memref<512x128xf32, #tpu.memory_space<vmem>>, vector<512x128xf32>
      tpu.vector_store %arg4[%c0_12, %c0_13], %12 {strides = array<i32>} : memref<512x128xf32, #tpu.memory_space<vmem>>, vector<512x128xf32>,
      %cst_14 = arith.constant dense<0.000000e+00> : vector<128xf32>
      %14 = vector.multi_reduction <add>, %12, %cst_14 [0] : vector<512x128xf32> to vector<128xf32>
      %15 = vector.shape_cast %14 : vector<128xf32> to vector<1x128xf32>
      %16 = vector.shape_cast %15 : vector<1x128xf32> to vector<1x1x128xf32>
      %c0_15 = arith.constant 0 : index
      %c0_16 = arith.constant 0 : index
      %c0_17 = arith.constant 0 : index
      %17 = vector.load %arg5[%c0_15, %c0_16, %c0_17] : memref<1x1x128xf32, #tpu.memory_space<vmem>>, vector<1x1x128xf32>
      tpu.vector_store %arg5[%c0_15, %c0_16, %c0_17], %16 {strides = array<i32>} : memref<1x1x128xf32, #tpu.memory_space<vmem>>, vector<1x1x128xf32>,
      %18 = arith.mulf %12, %12 : vector<512x128xf32>
      %cst_18 = arith.constant dense<0.000000e+00> : vector<128xf32>
      %19 = vector.multi_reduction <add>, %18, %cst_18 [0] : vector<512x128xf32> to vector<128xf32>
      %20 = vector.shape_cast %19 : vector<128xf32> to vector<1x128xf32>
      %21 = vector.shape_cast %20 : vector<1x128xf32> to vector<1x1x128xf32>
      %c0_19 = arith.constant 0 : index
      %c0_20 = arith.constant 0 : index
      %c0_21 = arith.constant 0 : index
      %22 = vector.load %arg6[%c0_19, %c0_20, %c0_21] : memref<1x1x128xf32, #tpu.memory_space<vmem>>, vector<1x1x128xf32>
      tpu.vector_store %arg6[%c0_19, %c0_20, %c0_21], %21 {strides = array<i32>} : memref<1x1x128xf32, #tpu.memory_space<vmem>>, vector<1x1x128xf32>,
    } else {
    }
    return
  }
  func.func @transform_0(%arg0: i32, %arg1: i32) -> (i32, i32) {
    %c0_i32 = arith.constant 0 : i32
    return %arg0, %arg1 : i32, i32
  }
  func.func @transform_1(%arg0: i32, %arg1: i32) -> (i32, i32) {
    %c0_i32 = arith.constant 0 : i32
    %c0_i32_0 = arith.constant 0 : i32
    return %arg1, %c0_i32 : i32, i32
  }
  func.func @transform_2(%arg0: i32, %arg1: i32) -> (i32, i32) {
    %c0_i32 = arith.constant 0 : i32
    %c0_i32_0 = arith.constant 0 : i32
    return %arg0, %c0_i32 : i32, i32
  }
  func.func @transform_3(%arg0: i32, %arg1: i32) -> (i32, i32, i32) {
    %c0_i32 = arith.constant 0 : i32
    %c0_i32_0 = arith.constant 0 : i32
    %c0_i32_1 = arith.constant 0 : i32
    return %arg0, %c0_i32, %c0_i32_0 : i32, i32, i32
  }
  func.func @transform_4(%arg0: i32, %arg1: i32) -> (i32, i32, i32) {
    %c0_i32 = arith.constant 0 : i32
    %c0_i32_0 = arith.constant 0 : i32
    %c0_i32_1 = arith.constant 0 : i32
    return %arg0, %c0_i32, %c0_i32_0 : i32, i32, i32
  }
}

module attributes {stable_mosaic.version = 11 : i64} {
  func.func @_scale_shift_act_kernel(%arg0: i32, %arg1: memref<512x128xf32, #tpu.memory_space<vmem>>, %arg2: memref<1x128xf32, #tpu.memory_space<vmem>>, %arg3: memref<1x128xf32, #tpu.memory_space<vmem>>, %arg4: memref<512x128xbf16, #tpu.memory_space<vmem>>) attributes {dimension_semantics = [#tpu.dimension_semantics<parallel>], iteration_bounds = array<i64: 1>, scalar_prefetch = 0 : i64, scratch_operands = 0 : i64, tpu.core_type = #tpu.core_type<tc>, window_params = [{transform_indices = @transform_0, window_bounds = array<i64: 512, 128>}, {pipeline_mode = #tpu.pipeline_mode<synchronous>, transform_indices = @transform_1, window_bounds = array<i64: 1, 128>}, {pipeline_mode = #tpu.pipeline_mode<synchronous>, transform_indices = @transform_2, window_bounds = array<i64: 1, 128>}, {transform_indices = @transform_3, window_bounds = array<i64: 512, 128>}]} {
    %c0 = arith.constant 0 : index
    %c0_0 = arith.constant 0 : index
    %0 = vector.load %arg1[%c0, %c0_0] : memref<512x128xf32, #tpu.memory_space<vmem>>, vector<512x128xf32>
    %c0_1 = arith.constant 0 : index
    %c0_2 = arith.constant 0 : index
    %1 = vector.load %arg2[%c0_1, %c0_2] : memref<1x128xf32, #tpu.memory_space<vmem>>, vector<1x128xf32>
    %2 = vector.broadcast %1 : vector<1x128xf32> to vector<512x128xf32>
    %3 = arith.mulf %0, %2 : vector<512x128xf32>
    %c0_3 = arith.constant 0 : index
    %c0_4 = arith.constant 0 : index
    %4 = vector.load %arg3[%c0_3, %c0_4] : memref<1x128xf32, #tpu.memory_space<vmem>>, vector<1x128xf32>
    %5 = vector.broadcast %4 : vector<1x128xf32> to vector<512x128xf32>
    %6 = arith.addf %3, %5 : vector<512x128xf32>
    %cst = arith.constant 0.000000e+00 : f32
    %7 = vector.broadcast %cst : f32 to vector<512x128xf32>
    %8 = arith.maximumf %6, %7 : vector<512x128xf32>
    %9 = arith.truncf %8 : vector<512x128xf32> to vector<512x128xbf16>
    %c0_5 = arith.constant 0 : index
    %c0_6 = arith.constant 0 : index
    %10 = vector.load %arg4[%c0_5, %c0_6] : memref<512x128xbf16, #tpu.memory_space<vmem>>, vector<512x128xbf16>
    tpu.vector_store %arg4[%c0_5, %c0_6], %9 {strides = array<i32>} : memref<512x128xbf16, #tpu.memory_space<vmem>>, vector<512x128xbf16>,
    return
  }
  func.func @transform_0(%arg0: i32) -> (i32, i32) {
    %c0_i32 = arith.constant 0 : i32
    %c0_i32_0 = arith.constant 0 : i32
    return %arg0, %c0_i32 : i32, i32
  }
  func.func @transform_1(%arg0: i32) -> (i32, i32) {
    %c0_i32 = arith.constant 0 : i32
    %c0_i32_0 = arith.constant 0 : i32
    %c0_i32_1 = arith.constant 0 : i32
    return %c0_i32, %c0_i32_0 : i32, i32
  }
  func.func @transform_2(%arg0: i32) -> (i32, i32) {
    %c0_i32 = arith.constant 0 : i32
    %c0_i32_0 = arith.constant 0 : i32
    %c0_i32_1 = arith.constant 0 : i32
    return %c0_i32, %c0_i32_0 : i32, i32
  }
  func.func @transform_3(%arg0: i32) -> (i32, i32) {
    %c0_i32 = arith.constant 0 : i32
    %c0_i32_0 = arith.constant 0 : i32
    return %arg0, %c0_i32 : i32, i32
  }
}

module attributes {stable_mosaic.version = 11 : i64} {
  func.func @_scale_shift_add_relu_kernel(%arg0: i32, %arg1: memref<512x128xf32, #tpu.memory_space<vmem>>, %arg2: memref<512x128xf32, #tpu.memory_space<vmem>>, %arg3: memref<1x128xf32, #tpu.memory_space<vmem>>, %arg4: memref<1x128xf32, #tpu.memory_space<vmem>>, %arg5: memref<512x128xf32, #tpu.memory_space<vmem>>) attributes {dimension_semantics = [#tpu.dimension_semantics<parallel>], iteration_bounds = array<i64: 1>, scalar_prefetch = 0 : i64, scratch_operands = 0 : i64, tpu.core_type = #tpu.core_type<tc>, window_params = [{transform_indices = @transform_0, window_bounds = array<i64: 512, 128>}, {transform_indices = @transform_1, window_bounds = array<i64: 512, 128>}, {pipeline_mode = #tpu.pipeline_mode<synchronous>, transform_indices = @transform_2, window_bounds = array<i64: 1, 128>}, {pipeline_mode = #tpu.pipeline_mode<synchronous>, transform_indices = @transform_3, window_bounds = array<i64: 1, 128>}, {transform_indices = @transform_4, window_bounds = array<i64: 512, 128>}]} {
    %c0 = arith.constant 0 : index
    %c0_0 = arith.constant 0 : index
    %0 = vector.load %arg1[%c0, %c0_0] : memref<512x128xf32, #tpu.memory_space<vmem>>, vector<512x128xf32>
    %c0_1 = arith.constant 0 : index
    %c0_2 = arith.constant 0 : index
    %1 = vector.load %arg3[%c0_1, %c0_2] : memref<1x128xf32, #tpu.memory_space<vmem>>, vector<1x128xf32>
    %2 = vector.broadcast %1 : vector<1x128xf32> to vector<512x128xf32>
    %3 = arith.mulf %0, %2 : vector<512x128xf32>
    %c0_3 = arith.constant 0 : index
    %c0_4 = arith.constant 0 : index
    %4 = vector.load %arg4[%c0_3, %c0_4] : memref<1x128xf32, #tpu.memory_space<vmem>>, vector<1x128xf32>
    %5 = vector.broadcast %4 : vector<1x128xf32> to vector<512x128xf32>
    %6 = arith.addf %3, %5 : vector<512x128xf32>
    %c0_5 = arith.constant 0 : index
    %c0_6 = arith.constant 0 : index
    %7 = vector.load %arg2[%c0_5, %c0_6] : memref<512x128xf32, #tpu.memory_space<vmem>>, vector<512x128xf32>
    %8 = arith.addf %6, %7 : vector<512x128xf32>
    %cst = arith.constant 0.000000e+00 : f32
    %9 = vector.broadcast %cst : f32 to vector<512x128xf32>
    %10 = arith.maximumf %8, %9 : vector<512x128xf32>
    %c0_7 = arith.constant 0 : index
    %c0_8 = arith.constant 0 : index
    %11 = vector.load %arg5[%c0_7, %c0_8] : memref<512x128xf32, #tpu.memory_space<vmem>>, vector<512x128xf32>
    tpu.vector_store %arg5[%c0_7, %c0_8], %10 {strides = array<i32>} : memref<512x128xf32, #tpu.memory_space<vmem>>, vector<512x128xf32>,
    return
  }
  func.func @transform_0(%arg0: i32) -> (i32, i32) {
    %c0_i32 = arith.constant 0 : i32
    %c0_i32_0 = arith.constant 0 : i32
    return %arg0, %c0_i32 : i32, i32
  }
  func.func @transform_1(%arg0: i32) -> (i32, i32) {
    %c0_i32 = arith.constant 0 : i32
    %c0_i32_0 = arith.constant 0 : i32
    return %arg0, %c0_i32 : i32, i32
  }
  func.func @transform_2(%arg0: i32) -> (i32, i32) {
    %c0_i32 = arith.constant 0 : i32
    %c0_i32_0 = arith.constant 0 : i32
    %c0_i32_1 = arith.constant 0 : i32
    return %c0_i32, %c0_i32_0 : i32, i32
  }
  func.func @transform_3(%arg0: i32) -> (i32, i32) {
    %c0_i32 = arith.constant 0 : i32
    %c0_i32_0 = arith.constant 0 : i32
    %c0_i32_1 = arith.constant 0 : i32
    return %c0_i32, %c0_i32_0 : i32, i32
  }
  func.func @transform_4(%arg0: i32) -> (i32, i32) {
    %c0_i32 = arith.constant 0 : i32
    %c0_i32_0 = arith.constant 0 : i32
    return %arg0, %c0_i32 : i32, i32
  }
}

</mosaic_0001>

<llo_original>
// kernel: _lambda_.5
$region0: #{_lambda_.5}
  #allocation0 [shape = 'u32[]', space=smem, size = 0x4, offset = 0x4, fixed_abs, tag = 'smem constant byte address 0x4 - core index']
  #allocation1 [shape = 'u32[72,128]{1,0:T(1,128)}', space=vmem, size = 0x9000, scoped, tag = 'internal scratch']
  %s0 = inlined_call_operand.vmem [shape: f32[512,128], index: 0, kind: input, shape index: {}]
  %s1 = inlined_call_operand.vmem [shape: f32[1,128], index: 1, kind: input, shape index: {}]
  %s2 = inlined_call_operand.vmem [shape: f32[1,128], index: 2, kind: input, shape index: {}]
  %s3 = inlined_call_operand.vmem [shape: bf16[512,128], index: 3, kind: output, shape index: {}]
  %s4 = sld [smem:[#allocation0]]
  $region22: #{_lambda_.5} parent=0
    _
  %s6 = ssub.s32 1, %s4
  %s7 = scalar_select 0, %s6, %s4
  // Predicated region
  $region2: #{_lambda_.5} parent=0 // pred_check
    _
  $region3: #{_lambda_.5} parent=0 // pred_check_branch
    %9 = sbr.rel (0) target = $region5
  $region4: #{_lambda_.5} parent=0 // pred_region
    _
  $region5: #{_lambda_.5} parent=0 // pred_fallthru
    _
  // Predicated region
  $region6: #{_lambda_.5} parent=0 // pred_check
    _
  $region7: #{_lambda_.5} parent=0 // pred_check_branch
    %11 = sbr.rel (0) target = $region9
  $region8: #{_lambda_.5} parent=0 // pred_region
    _
  $region9: #{_lambda_.5} parent=0 // pred_fallthru
    _
  // Predicated region
  $region10: #{_lambda_.5} parent=0 // pred_check
    _
  $region11: #{_lambda_.5} parent=0 // pred_check_branch
    %13 = sbr.rel (0) target = $region13
  $region12: #{_lambda_.5} parent=0 // pred_region
    _
  $region13: #{_lambda_.5} parent=0 // pred_fallthru
    _
  %v14 = vld [vmem:[%s0] sm:$0xff]
  %v15 = vld [vmem:[%s0 + $0x8] sm:$0xff]
  %v16 = vld [vmem:[%s0 + $0x10] sm:$0xff]
  %v17 = vld [vmem:[%s0 + $0x18] sm:$0xff]
  %v18 = vld [vmem:[%s0 + $0x20] sm:$0xff]
  %v19 = vld [vmem:[%s0 + $0x28] sm:$0xff]
  %v20 = vld [vmem:[%s0 + $0x30] sm:$0xff]
  %v21 = vld [vmem:[%s0 + $0x38] sm:$0xff]
  %v22 = vld [vmem:[%s0 + $0x40] sm:$0xff]
  %v23 = vld [vmem:[%s0 + $0x48] sm:$0xff]
  %v24 = vld [vmem:[%s0 + $0x50] sm:$0xff]
  %v25 = vld [vmem:[%s0 + $0x58] sm:$0xff]
  %v26 = vld [vmem:[%s0 + $0x60] sm:$0xff]
  %v27 = vld [vmem:[%s0 + $0x68] sm:$0xff]
  %v28 = vld [vmem:[%s0 + $0x70] sm:$0xff]
  %v29 = vld [vmem:[%s0 + $0x78] sm:$0xff]
  %v30 = vld [vmem:[%s0 + $0x80] sm:$0xff]
  %v31 = vld [vmem:[%s0 + $0x88] sm:$0xff]
  %v32 = vld [vmem:[%s0 + $0x90] sm:$0xff]
  %v33 = vld [vmem:[%s0 + $0x98] sm:$0xff]
  %v34 = vld [vmem:[%s0 + $0xa0] sm:$0xff]
  %v35 = vld [vmem:[%s0 + $0xa8] sm:$0xff]
  %v36 = vld [vmem:[%s0 + $0xb0] sm:$0xff]
  %v37 = vld [vmem:[%s0 + $0xb8] sm:$0xff]
  %v38 = vld [vmem:[%s0 + $0xc0] sm:$0xff]
  %v39 = vld [vmem:[%s0 + $0xc8] sm:$0xff]
  %v40 = vld [vmem:[%s0 + $0xd0] sm:$0xff]
  %v41 = vld [vmem:[%s0 + $0xd8] sm:$0xff]
  %v42 = vld [vmem:[%s0 + $0xe0] sm:$0xff]
  %v43 = vld [vmem:[%s0 + $0xe8] sm:$0xff]
  %v44 = vld [vmem:[%s0 + $0xf0] sm:$0xff]
  %v45 = vld [vmem:[%s0 + $0xf8] sm:$0xff]
  %v46 = vld [vmem:[%s0 + $0x100] sm:$0xff]
  %v47 = vld [vmem:[%s0 + $0x108] sm:$0xff]
  %v48 = vld [vmem:[%s0 + $0x110] sm:$0xff]
  %v49 = vld [vmem:[%s0 + $0x118] sm:$0xff]
  %v50 = vld [vmem:[%s0 + $0x120] sm:$0xff]
  %v51 = vld [vmem:[%s0 + $0x128] sm:$0xff]
  %v52 = vld [vmem:[%s0 + $0x130] sm:$0xff]
  %v53 = vld [vmem:[%s0 + $0x138] sm:$0xff]
  %v54 = vld [vmem:[%s0 + $0x140] sm:$0xff]
  %v55 = vld [vmem:[%s0 + $0x148] sm:$0xff]
  %v56 = vld [vmem:[%s0 + $0x150] sm:$0xff]
  %v57 = vld [vmem:[%s0 + $0x158] sm:$0xff]
  %v58 = vld [vmem:[%s0 + $0x160] sm:$0xff]
  %v59 = vld [vmem:[%s0 + $0x168] sm:$0xff]
  %v60 = vld [vmem:[%s0 + $0x170] sm:$0xff]
  %v61 = vld [vmem:[%s0 + $0x178] sm:$0xff]
  %v62 = vld [vmem:[%s0 + $0x180] sm:$0xff]
  %v63 = vld [vmem:[%s0 + $0x188] sm:$0xff]
  %v64 = vld [vmem:[%s0 + $0x190] sm:$0xff]
  %v65 = vld [vmem:[%s0 + $0x198] sm:$0xff]
  %v66 = vld [vmem:[%s0 + $0x1a0] sm:$0xff]
  %v67 = vld [vmem:[%s0 + $0x1a8] sm:$0xff]
  %v68 = vld [vmem:[%s0 + $0x1b0] sm:$0xff]
  %v69 = vld [vmem:[%s0 + $0x1b8] sm:$0xff]
  %v70 = vld [vmem:[%s0 + $0x1c0] sm:$0xff]
  %v71 = vld [vmem:[%s0 + $0x1c8] sm:$0xff]
  %v72 = vld [vmem:[%s0 + $0x1d0] sm:$0xff]
  %v73 = vld [vmem:[%s0 + $0x1d8] sm:$0xff]
  %v74 = vld [vmem:[%s0 + $0x1e0] sm:$0xff]
  %v75 = vld [vmem:[%s0 + $0x1e8] sm:$0xff]
  %v76 = vld [vmem:[%s0 + $0x1f0] sm:$0xff]
  %v77 = vld [vmem:[%s0 + $0x1f8] sm:$0xff]
  %v78 = vld [vmem:[%s1] sm:$0x1]
  %v80 = vperm.slane %v78, 0
  %v82 = vmul.f32 %v14, %v80
  %v83 = vmul.f32 %v15, %v80
  %v84 = vmul.f32 %v16, %v80
  %v85 = vmul.f32 %v17, %v80
  %v86 = vmul.f32 %v18, %v80
  %v87 = vmul.f32 %v19, %v80
  %v88 = vmul.f32 %v20, %v80
  %v89 = vmul.f32 %v21, %v80
  %v90 = vmul.f32 %v22, %v80
  %v91 = vmul.f32 %v23, %v80
  %v92 = vmul.f32 %v24, %v80
  %v93 = vmul.f32 %v25, %v80
  %v94 = vmul.f32 %v26, %v80
  %v95 = vmul.f32 %v27, %v80
  %v96 = vmul.f32 %v28, %v80
  %v97 = vmul.f32 %v29, %v80
  %v98 = vmul.f32 %v30, %v80
  %v99 = vmul.f32 %v31, %v80
  %v100 = vmul.f32 %v32, %v80
  %v101 = vmul.f32 %v33, %v80
  %v102 = vmul.f32 %v34, %v80
  %v103 = vmul.f32 %v35, %v80
  %v104 = vmul.f32 %v36, %v80
  %v105 = vmul.f32 %v37, %v80
  %v106 = vmul.f32 %v38, %v80
  %v107 = vmul.f32 %v39, %v80
  %v108 = vmul.f32 %v40, %v80
  %v109 = vmul.f32 %v41, %v80
  %v110 = vmul.f32 %v42, %v80
  %v111 = vmul.f32 %v43, %v80
  %v112 = vmul.f32 %v44, %v80
  %v113 = vmul.f32 %v45, %v80
  %v114 = vmul.f32 %v46, %v80
  %v115 = vmul.f32 %v47, %v80
  %v116 = vmul.f32 %v48, %v80
  %v117 = vmul.f32 %v49, %v80
  %v118 = vmul.f32 %v50, %v80
  %v119 = vmul.f32 %v51, %v80
  %v120 = vmul.f32 %v52, %v80
  %v121 = vmul.f32 %v53, %v80
  %v122 = vmul.f32 %v54, %v80
  %v123 = vmul.f32 %v55, %v80
  %v124 = vmul.f32 %v56, %v80
  %v125 = vmul.f32 %v57, %v80
  %v126 = vmul.f32 %v58, %v80
  %v127 = vmul.f32 %v59, %v80
  %v128 = vmul.f32 %v60, %v80
  %v129 = vmul.f32 %v61, %v80
  %v130 = vmul.f32 %v62, %v80
  %v131 = vmul.f32 %v63, %v80
  %v132 = vmul.f32 %v64, %v80
  %v133 = vmul.f32 %v65, %v80
  %v134 = vmul.f32 %v66, %v80
  %v135 = vmul.f32 %v67, %v80
  %v136 = vmul.f32 %v68, %v80
  %v137 = vmul.f32 %v69, %v80
  %v138 = vmul.f32 %v70, %v80
  %v139 = vmul.f32 %v71, %v80
  %v140 = vmul.f32 %v72, %v80
  %v141 = vmul.f32 %v73, %v80
  %v142 = vmul.f32 %v74, %v80
  %v143 = vmul.f32 %v75, %v80
  %v144 = vmul.f32 %v76, %v80
  %v145 = vmul.f32 %v77, %v80
  %v146 = vld [vmem:[%s2] sm:$0x1]
  %v148 = vperm.slane %v146, 0
  %v150 = vadd.f32 %v82, %v148
  %v151 = vadd.f32 %v83, %v148
  %v152 = vadd.f32 %v84, %v148
  %v153 = vadd.f32 %v85, %v148
  %v154 = vadd.f32 %v86, %v148
  %v155 = vadd.f32 %v87, %v148
  %v156 = vadd.f32 %v88, %v148
  %v157 = vadd.f32 %v89, %v148
  %v158 = vadd.f32 %v90, %v148
  %v159 = vadd.f32 %v91, %v148
  %v160 = vadd.f32 %v92, %v148
  %v161 = vadd.f32 %v93, %v148
  %v162 = vadd.f32 %v94, %v148
  %v163 = vadd.f32 %v95, %v148
  %v164 = vadd.f32 %v96, %v148
  %v165 = vadd.f32 %v97, %v148
  %v166 = vadd.f32 %v98, %v148
  %v167 = vadd.f32 %v99, %v148
  %v168 = vadd.f32 %v100, %v148
  %v169 = vadd.f32 %v101, %v148
  %v170 = vadd.f32 %v102, %v148
  %v171 = vadd.f32 %v103, %v148
  %v172 = vadd.f32 %v104, %v148
  %v173 = vadd.f32 %v105, %v148
  %v174 = vadd.f32 %v106, %v148
  %v175 = vadd.f32 %v107, %v148
  %v176 = vadd.f32 %v108, %v148
  %v177 = vadd.f32 %v109, %v148
  %v178 = vadd.f32 %v110, %v148
  %v179 = vadd.f32 %v111, %v148
  %v180 = vadd.f32 %v112, %v148
  %v181 = vadd.f32 %v113, %v148
  %v182 = vadd.f32 %v114, %v148
  %v183 = vadd.f32 %v115, %v148
  %v184 = vadd.f32 %v116, %v148
  %v185 = vadd.f32 %v117, %v148
  %v186 = vadd.f32 %v118, %v148
  %v187 = vadd.f32 %v119, %v148
  %v188 = vadd.f32 %v120, %v148
  %v189 = vadd.f32 %v121, %v148
  %v190 = vadd.f32 %v122, %v148
  %v191 = vadd.f32 %v123, %v148
  %v192 = vadd.f32 %v124, %v148
  %v193 = vadd.f32 %v125, %v148
  %v194 = vadd.f32 %v126, %v148
  %v195 = vadd.f32 %v127, %v148
  %v196 = vadd.f32 %v128, %v148
  %v197 = vadd.f32 %v129, %v148
  %v198 = vadd.f32 %v130, %v148
  %v199 = vadd.f32 %v131, %v148
  %v200 = vadd.f32 %v132, %v148
  %v201 = vadd.f32 %v133, %v148
  %v202 = vadd.f32 %v134, %v148
  %v203 = vadd.f32 %v135, %v148
  %v204 = vadd.f32 %v136, %v148
  %v205 = vadd.f32 %v137, %v148
  %v206 = vadd.f32 %v138, %v148
  %v207 = vadd.f32 %v139, %v148
  %v208 = vadd.f32 %v140, %v148
  %v209 = vadd.f32 %v141, %v148
  %v210 = vadd.f32 %v142, %v148
  %v211 = vadd.f32 %v143, %v148
  %v212 = vadd.f32 %v144, %v148
  %v213 = vadd.f32 %v145, %v148
  %v214 = vmax.f32 %v150, 0.0
  %v215 = vmax.f32 %v151, 0.0
  %v216 = vmax.f32 %v152, 0.0
  %v217 = vmax.f32 %v153, 0.0
  %v218 = vmax.f32 %v154, 0.0
  %v219 = vmax.f32 %v155, 0.0
  %v220 = vmax.f32 %v156, 0.0
  %v221 = vmax.f32 %v157, 0.0
  %v222 = vmax.f32 %v158, 0.0
  %v223 = vmax.f32 %v159, 0.0
  %v224 = vmax.f32 %v160, 0.0
  %v225 = vmax.f32 %v161, 0.0
  %v226 = vmax.f32 %v162, 0.0
  %v227 = vmax.f32 %v163, 0.0
  %v228 = vmax.f32 %v164, 0.0
  %v229 = vmax.f32 %v165, 0.0
  %v230 = vmax.f32 %v166, 0.0
  %v231 = vmax.f32 %v167, 0.0
  %v232 = vmax.f32 %v168, 0.0
  %v233 = vmax.f32 %v169, 0.0
  %v234 = vmax.f32 %v170, 0.0
  %v235 = vmax.f32 %v171, 0.0
  %v236 = vmax.f32 %v172, 0.0
  %v237 = vmax.f32 %v173, 0.0
  %v238 = vmax.f32 %v174, 0.0
  %v239 = vmax.f32 %v175, 0.0
  %v240 = vmax.f32 %v176, 0.0
  %v241 = vmax.f32 %v177, 0.0
  %v242 = vmax.f32 %v178, 0.0
  %v243 = vmax.f32 %v179, 0.0
  %v244 = vmax.f32 %v180, 0.0
  %v245 = vmax.f32 %v181, 0.0
  %v246 = vmax.f32 %v182, 0.0
  %v247 = vmax.f32 %v183, 0.0
  %v248 = vmax.f32 %v184, 0.0
  %v249 = vmax.f32 %v185, 0.0
  %v250 = vmax.f32 %v186, 0.0
  %v251 = vmax.f32 %v187, 0.0
  %v252 = vmax.f32 %v188, 0.0
  %v253 = vmax.f32 %v189, 0.0
  %v254 = vmax.f32 %v190, 0.0
  %v255 = vmax.f32 %v191, 0.0
  %v256 = vmax.f32 %v192, 0.0
  %v257 = vmax.f32 %v193, 0.0
  %v258 = vmax.f32 %v194, 0.0
  %v259 = vmax.f32 %v195, 0.0
  %v260 = vmax.f32 %v196, 0.0
  %v261 = vmax.f32 %v197, 0.0
  %v262 = vmax.f32 %v198, 0.0
  %v263 = vmax.f32 %v199, 0.0
  %v264 = vmax.f32 %v200, 0.0
  %v265 = vmax.f32 %v201, 0.0
  %v266 = vmax.f32 %v202, 0.0
  %v267 = vmax.f32 %v203, 0.0
  %v268 = vmax.f32 %v204, 0.0
  %v269 = vmax.f32 %v205, 0.0
  %v270 = vmax.f32 %v206, 0.0
  %v271 = vmax.f32 %v207, 0.0
  %v272 = vmax.f32 %v208, 0.0
  %v273 = vmax.f32 %v209, 0.0
  %v274 = vmax.f32 %v210, 0.0
  %v275 = vmax.f32 %v211, 0.0
  %v276 = vmax.f32 %v212, 0.0
  %v277 = vmax.f32 %v213, 0.0
  %v278 = vpack.c.bf16 %v214, %v214
  %v279 = vpack.c.bf16 %v215, %v215
  %v280 = vpack.c.bf16 %v216, %v216
  %v281 = vpack.c.bf16 %v217, %v217
  %v282 = vpack.c.bf16 %v218, %v218
  %v283 = vpack.c.bf16 %v219, %v219
  %v284 = vpack.c.bf16 %v220, %v220
  %v285 = vpack.c.bf16 %v221, %v221
  %v286 = vpack.c.bf16 %v222, %v222
  %v287 = vpack.c.bf16 %v223, %v223
  %v288 = vpack.c.bf16 %v224, %v224
  %v289 = vpack.c.bf16 %v225, %v225
  %v290 = vpack.c.bf16 %v226, %v226
  %v291 = vpack.c.bf16 %v227, %v227
  %v292 = vpack.c.bf16 %v228, %v228
  %v293 = vpack.c.bf16 %v229, %v229
  %v294 = vpack.c.bf16 %v230, %v230
  %v295 = vpack.c.bf16 %v231, %v231
  %v296 = vpack.c.bf16 %v232, %v232
  %v297 = vpack.c.bf16 %v233, %v233
  %v298 = vpack.c.bf16 %v234, %v234
  %v299 = vpack.c.bf16 %v235, %v235
  %v300 = vpack.c.bf16 %v236, %v236
  %v301 = vpack.c.bf16 %v237, %v237
  %v302 = vpack.c.bf16 %v238, %v238
  %v303 = vpack.c.bf16 %v239, %v239
  %v304 = vpack.c.bf16 %v240, %v240
  %v305 = vpack.c.bf16 %v241, %v241
  %v306 = vpack.c.bf16 %v242, %v242
  %v307 = vpack.c.bf16 %v243, %v243
  %v308 = vpack.c.bf16 %v244, %v244
  %v309 = vpack.c.bf16 %v245, %v245
  %v310 = vpack.c.bf16 %v246, %v246
  %v311 = vpack.c.bf16 %v247, %v247
  %v312 = vpack.c.bf16 %v248, %v248
  %v313 = vpack.c.bf16 %v249, %v249
  %v314 = vpack.c.bf16 %v250, %v250
  %v315 = vpack.c.bf16 %v251, %v251
  %v316 = vpack.c.bf16 %v252, %v252
  %v317 = vpack.c.bf16 %v253, %v253
  %v318 = vpack.c.bf16 %v254, %v254
  %v319 = vpack.c.bf16 %v255, %v255
  %v320 = vpack.c.bf16 %v256, %v256
  %v321 = vpack.c.bf16 %v257, %v257
  %v322 = vpack.c.bf16 %v258, %v258
  %v323 = vpack.c.bf16 %v259, %v259
  %v324 = vpack.c.bf16 %v260, %v260
  %v325 = vpack.c.bf16 %v261, %v261
  %v326 = vpack.c.bf16 %v262, %v262
  %v327 = vpack.c.bf16 %v263, %v263
  %v328 = vpack.c.bf16 %v264, %v264
  %v329 = vpack.c.bf16 %v265, %v265
  %v330 = vpack.c.bf16 %v266, %v266
  %v331 = vpack.c.bf16 %v267, %v267
  %v332 = vpack.c.bf16 %v268, %v268
  %v333 = vpack.c.bf16 %v269, %v269
  %v334 = vpack.c.bf16 %v270, %v270
  %v335 = vpack.c.bf16 %v271, %v271
  %v336 = vpack.c.bf16 %v272, %v272
  %v337 = vpack.c.bf16 %v273, %v273
  %v338 = vpack.c.bf16 %v274, %v274
  %v339 = vpack.c.bf16 %v275, %v275
  %v340 = vpack.c.bf16 %v276, %v276
  %v341 = vpack.c.bf16 %v277, %v277
  %342 = vst [vmem:[%s3] sm:$0xf] %v278
  %343 = vst [vmem:[%s3 + $0x4] sm:$0xf] %v279
  %344 = vst [vmem:[%s3 + $0x8] sm:$0xf] %v280
  %345 = vst [vmem:[%s3 + $0xc] sm:$0xf] %v281
  %346 = vst [vmem:[%s3 + $0x10] sm:$0xf] %v282
  %347 = vst [vmem:[%s3 + $0x14] sm:$0xf] %v283
  %348 = vst [vmem:[%s3 + $0x18] sm:$0xf] %v284
  %349 = vst [vmem:[%s3 + $0x1c] sm:$0xf] %v285
  %350 = vst [vmem:[%s3 + $0x20] sm:$0xf] %v286
  %351 = vst [vmem:[%s3 + $0x24] sm:$0xf] %v287
  %352 = vst [vmem:[%s3 + $0x28] sm:$0xf] %v288
  %353 = vst [vmem:[%s3 + $0x2c] sm:$0xf] %v289
  %354 = vst [vmem:[%s3 + $0x30] sm:$0xf] %v290
  %355 = vst [vmem:[%s3 + $0x34] sm:$0xf] %v291
  %356 = vst [vmem:[%s3 + $0x38] sm:$0xf] %v292
  %357 = vst [vmem:[%s3 + $0x3c] sm:$0xf] %v293
  %358 = vst [vmem:[%s3 + $0x40] sm:$0xf] %v294
  %359 = vst [vmem:[%s3 + $0x44] sm:$0xf] %v295
  %360 = vst [vmem:[%s3 + $0x48] sm:$0xf] %v296
  %361 = vst [vmem:[%s3 + $0x4c] sm:$0xf] %v297
  %362 = vst [vmem:[%s3 + $0x50] sm:$0xf] %v298
  %363 = vst [vmem:[%s3 + $0x54] sm:$0xf] %v299
  %364 = vst [vmem:[%s3 + $0x58] sm:$0xf] %v300
  %365 = vst [vmem:[%s3 + $0x5c] sm:$0xf] %v301
  %366 = vst [vmem:[%s3 + $0x60] sm:$0xf] %v302
  %367 = vst [vmem:[%s3 + $0x64] sm:$0xf] %v303
  %368 = vst [vmem:[%s3 + $0x68] sm:$0xf] %v304
  %369 = vst [vmem:[%s3 + $0x6c] sm:$0xf] %v305
  %370 = vst [vmem:[%s3 + $0x70] sm:$0xf] %v306
  %371 = vst [vmem:[%s3 + $0x74] sm:$0xf] %v307
  %372 = vst [vmem:[%s3 + $0x78] sm:$0xf] %v308
  %373 = vst [vmem:[%s3 + $0x7c] sm:$0xf] %v309
  %374 = vst [vmem:[%s3 + $0x80] sm:$0xf] %v310
  %375 = vst [vmem:[%s3 + $0x84] sm:$0xf] %v311
  %376 = vst [vmem:[%s3 + $0x88] sm:$0xf] %v312
  %377 = vst [vmem:[%s3 + $0x8c] sm:$0xf] %v313
  %378 = vst [vmem:[%s3 + $0x90] sm:$0xf] %v314
  %379 = vst [vmem:[%s3 + $0x94] sm:$0xf] %v315
  %380 = vst [vmem:[%s3 + $0x98] sm:$0xf] %v316
  %381 = vst [vmem:[%s3 + $0x9c] sm:$0xf] %v317
  %382 = vst [vmem:[%s3 + $0xa0] sm:$0xf] %v318
  %383 = vst [vmem:[%s3 + $0xa4] sm:$0xf] %v319
  %384 = vst [vmem:[%s3 + $0xa8] sm:$0xf] %v320
  %385 = vst [vmem:[%s3 + $0xac] sm:$0xf] %v321
  %386 = vst [vmem:[%s3 + $0xb0] sm:$0xf] %v322
  %387 = vst [vmem:[%s3 + $0xb4] sm:$0xf] %v323
  %388 = vst [vmem:[%s3 + $0xb8] sm:$0xf] %v324
  %389 = vst [vmem:[%s3 + $0xbc] sm:$0xf] %v325
  %390 = vst [vmem:[%s3 + $0xc0] sm:$0xf] %v326
  %391 = vst [vmem:[%s3 + $0xc4] sm:$0xf] %v327
  %392 = vst [vmem:[%s3 + $0xc8] sm:$0xf] %v328
  %393 = vst [vmem:[%s3 + $0xcc] sm:$0xf] %v329
  %394 = vst [vmem:[%s3 + $0xd0] sm:$0xf] %v330
  %395 = vst [vmem:[%s3 + $0xd4] sm:$0xf] %v331
  %396 = vst [vmem:[%s3 + $0xd8] sm:$0xf] %v332
  %397 = vst [vmem:[%s3 + $0xdc] sm:$0xf] %v333
  %398 = vst [vmem:[%s3 + $0xe0] sm:$0xf] %v334
  %399 = vst [vmem:[%s3 + $0xe4] sm:$0xf] %v335
  %400 = vst [vmem:[%s3 + $0xe8] sm:$0xf] %v336
  %401 = vst [vmem:[%s3 + $0xec] sm:$0xf] %v337
  %402 = vst [vmem:[%s3 + $0xf0] sm:$0xf] %v338
  %403 = vst [vmem:[%s3 + $0xf4] sm:$0xf] %v339
  %404 = vst [vmem:[%s3 + $0xf8] sm:$0xf] %v340
  %405 = vst [vmem:[%s3 + $0xfc] sm:$0xf] %v341
  // Predicated region
  $region14: #{_lambda_.5} parent=0 // pred_check
    _
  $region15: #{_lambda_.5} parent=0 // pred_check_branch
    %407 = sbr.rel (0) target = $region17
  $region16: #{_lambda_.5} parent=0 // pred_region
    _
  $region17: #{_lambda_.5} parent=0 // pred_fallthru
    _
  // Predicated region
  $region18: #{_lambda_.5} parent=0 // pred_check
    _
  $region19: #{_lambda_.5} parent=0 // pred_check_branch
    %409 = sbr.rel (0) target = $region21
  $region20: #{_lambda_.5} parent=0 // pred_region
    _
  $region21: #{_lambda_.5} parent=0 // pred_fallthru
    _

// kernel: _lambda_.4
$region0: #{_lambda_.4}
  #allocation0 [shape = 'u32[]', space=smem, size = 0x4, offset = 0x4, fixed_abs, tag = 'smem constant byte address 0x4 - core index']
  #allocation1 [shape = 'u32[72,128]{1,0:T(1,128)}', space=vmem, size = 0x9000, scoped, tag = 'internal scratch']
  #allocation2 [shape = 'f32[512,128]{1,0:T(8,128)}', space=vmem, size = 0x40000, scoped, tag = 'scratch operand']
  %s0 = inlined_call_operand.vmem [shape: bf16[512,128], index: 0, kind: input, shape index: {}]
  %s1 = inlined_call_operand.vmem [shape: bf16[128,128], index: 1, kind: input, shape index: {}]
  %s2 = inlined_call_operand.vmem [shape: f32[512,128], index: 2, kind: output, shape index: {0}]
  %s3 = inlined_call_operand.vmem [shape: f32[1,1,128], index: 3, kind: output, shape index: {1}]
  %s4 = inlined_call_operand.vmem [shape: f32[1,1,128], index: 4, kind: output, shape index: {2}]
  %5 = xla_tuple %s2, %s3, %s4
  %s6 = sld [smem:[#allocation0]]
  $region42: #{_lambda_.4} parent=0
    _
  %s8 = ssub.s32 1, %s6
  %s9 = scalar_select 0, %s8, %s6
  // Predicated region
  $region2: #{_lambda_.4} parent=0 // pred_check
    _
  $region3: #{_lambda_.4} parent=0 // pred_check_branch
    %11 = sbr.rel (0) target = $region5
  $region4: #{_lambda_.4} parent=0 // pred_region
    _
  $region5: #{_lambda_.4} parent=0 // pred_fallthru
    _
  // Predicated region
  $region6: #{_lambda_.4} parent=0 // pred_check
    _
  $region7: #{_lambda_.4} parent=0 // pred_check_branch
    %13 = sbr.rel (0) target = $region9
  $region8: #{_lambda_.4} parent=0 // pred_region
    _
  $region9: #{_lambda_.4} parent=0 // pred_fallthru
    _
  %p14 = scmp.eq.s32.totalorder 0, 0
  // Predicated region
  $region10: #{_lambda_.4} parent=0 // pred_check
    %p15 = pneg %p14
  $region11: #{_lambda_.4} parent=0 // pred_check_branch
    %17 = sbr.rel (%p15) target = $region13
  $region12: #{_lambda_.4} parent=0 // pred_region
    %18 = vst [vmem:[#allocation2] sm:$0xff] 0.0
    %19 = vst [vmem:[#allocation2 + $0x8] sm:$0xff] 0.0
    %20 = vst [vmem:[#allocation2 + $0x10] sm:$0xff] 0.0
    %21 = vst [vmem:[#allocation2 + $0x18] sm:$0xff] 0.0
    %22 = vst [vmem:[#allocation2 + $0x20] sm:$0xff] 0.0
    %23 = vst [vmem:[#allocation2 + $0x28] sm:$0xff] 0.0
    %24 = vst [vmem:[#allocation2 + $0x30] sm:$0xff] 0.0
    %25 = vst [vmem:[#allocation2 + $0x38] sm:$0xff] 0.0
    %26 = vst [vmem:[#allocation2 + $0x40] sm:$0xff] 0.0
    %27 = vst [vmem:[#allocation2 + $0x48] sm:$0xff] 0.0
    %28 = vst [vmem:[#allocation2 + $0x50] sm:$0xff] 0.0
    %29 = vst [vmem:[#allocation2 + $0x58] sm:$0xff] 0.0
    %30 = vst [vmem:[#allocation2 + $0x60] sm:$0xff] 0.0
    %31 = vst [vmem:[#allocation2 + $0x68] sm:$0xff] 0.0
    %32 = vst [vmem:[#allocation2 + $0x70] sm:$0xff] 0.0
    %33 = vst [vmem:[#allocation2 + $0x78] sm:$0xff] 0.0
    %34 = vst [vmem:[#allocation2 + $0x80] sm:$0xff] 0.0
    %35 = vst [vmem:[#allocation2 + $0x88] sm:$0xff] 0.0
    %36 = vst [vmem:[#allocation2 + $0x90] sm:$0xff] 0.0
    %37 = vst [vmem:[#allocation2 + $0x98] sm:$0xff] 0.0
    %38 = vst [vmem:[#allocation2 + $0xa0] sm:$0xff] 0.0
    %39 = vst [vmem:[#allocation2 + $0xa8] sm:$0xff] 0.0
    %40 = vst [vmem:[#allocation2 + $0xb0] sm:$0xff] 0.0
    %41 = vst [vmem:[#allocation2 + $0xb8] sm:$0xff] 0.0
    %42 = vst [vmem:[#allocation2 + $0xc0] sm:$0xff] 0.0
    %43 = vst [vmem:[#allocation2 + $0xc8] sm:$0xff] 0.0
    %44 = vst [vmem:[#allocation2 + $0xd0] sm:$0xff] 0.0
    %45 = vst [vmem:[#allocation2 + $0xd8] sm:$0xff] 0.0
    %46 = vst [vmem:[#allocation2 + $0xe0] sm:$0xff] 0.0
    %47 = vst [vmem:[#allocation2 + $0xe8] sm:$0xff] 0.0
    %48 = vst [vmem:[#allocation2 + $0xf0] sm:$0xff] 0.0
    %49 = vst [vmem:[#allocation2 + $0xf8] sm:$0xff] 0.0
    %50 = vst [vmem:[#allocation2 + $0x100] sm:$0xff] 0.0
    %51 = vst [vmem:[#allocation2 + $0x108] sm:$0xff] 0.0
    %52 = vst [vmem:[#allocation2 + $0x110] sm:$0xff] 0.0
    %53 = vst [vmem:[#allocation2 + $0x118] sm:$0xff] 0.0
    %54 = vst [vmem:[#allocation2 + $0x120] sm:$0xff] 0.0
    %55 = vst [vmem:[#allocation2 + $0x128] sm:$0xff] 0.0
    %56 = vst [vmem:[#allocation2 + $0x130] sm:$0xff] 0.0
    %57 = vst [vmem:[#allocation2 + $0x138] sm:$0xff] 0.0
    %58 = vst [vmem:[#allocation2 + $0x140] sm:$0xff] 0.0
    %59 = vst [vmem:[#allocation2 + $0x148] sm:$0xff] 0.0
    %60 = vst [vmem:[#allocation2 + $0x150] sm:$0xff] 0.0
    %61 = vst [vmem:[#allocation2 + $0x158] sm:$0xff] 0.0
    %62 = vst [vmem:[#allocation2 + $0x160] sm:$0xff] 0.0
    %63 = vst [vmem:[#allocation2 + $0x168] sm:$0xff] 0.0
    %64 = vst [vmem:[#allocation2 + $0x170] sm:$0xff] 0.0
    %65 = vst [vmem:[#allocation2 + $0x178] sm:$0xff] 0.0
    %66 = vst [vmem:[#allocation2 + $0x180] sm:$0xff] 0.0
    %67 = vst [vmem:[#allocation2 + $0x188] sm:$0xff] 0.0
    %68 = vst [vmem:[#allocation2 + $0x190] sm:$0xff] 0.0
    %69 = vst [vmem:[#allocation2 + $0x198] sm:$0xff] 0.0
    %70 = vst [vmem:[#allocation2 + $0x1a0] sm:$0xff] 0.0
    %71 = vst [vmem:[#allocation2 + $0x1a8] sm:$0xff] 0.0
    %72 = vst [vmem:[#allocation2 + $0x1b0] sm:$0xff] 0.0
    %73 = vst [vmem:[#allocation2 + $0x1b8] sm:$0xff] 0.0
    %74 = vst [vmem:[#allocation2 + $0x1c0] sm:$0xff] 0.0
    %75 = vst [vmem:[#allocation2 + $0x1c8] sm:$0xff] 0.0
    %76 = vst [vmem:[#allocation2 + $0x1d0] sm:$0xff] 0.0
    %77 = vst [vmem:[#allocation2 + $0x1d8] sm:$0xff] 0.0
    %78 = vst [vmem:[#allocation2 + $0x1e0] sm:$0xff] 0.0
    %79 = vst [vmem:[#allocation2 + $0x1e8] sm:$0xff] 0.0
    %80 = vst [vmem:[#allocation2 + $0x1f0] sm:$0xff] 0.0
    %81 = vst [vmem:[#allocation2 + $0x1f8] sm:$0xff] 0.0
  $region13: #{_lambda_.4} parent=0 // pred_fallthru
    _
  %v82 = vld [vmem:[#allocation2] sm:$0xff]
  %v83 = vld [vmem:[#allocation2 + $0x8] sm:$0xff]
  %v84 = vld [vmem:[#allocation2 + $0x10] sm:$0xff]
  %v85 = vld [vmem:[#allocation2 + $0x18] sm:$0xff]
  %v86 = vld [vmem:[#allocation2 + $0x20] sm:$0xff]
  %v87 = vld [vmem:[#allocation2 + $0x28] sm:$0xff]
  %v88 = vld [vmem:[#allocation2 + $0x30] sm:$0xff]
  %v89 = vld [vmem:[#allocation2 + $0x38] sm:$0xff]
  %v90 = vld [vmem:[#allocation2 + $0x40] sm:$0xff]
  %v91 = vld [vmem:[#allocation2 + $0x48] sm:$0xff]
  %v92 = vld [vmem:[#allocation2 + $0x50] sm:$0xff]
  %v93 = vld [vmem:[#allocation2 + $0x58] sm:$0xff]
  %v94 = vld [vmem:[#allocation2 + $0x60] sm:$0xff]
  %v95 = vld [vmem:[#allocation2 + $0x68] sm:$0xff]
  %v96 = vld [vmem:[#allocation2 + $0x70] sm:$0xff]
  %v97 = vld [vmem:[#allocation2 + $0x78] sm:$0xff]
  %v98 = vld [vmem:[#allocation2 + $0x80] sm:$0xff]
  %v99 = vld [vmem:[#allocation2 + $0x88] sm:$0xff]
  %v100 = vld [vmem:[#allocation2 + $0x90] sm:$0xff]
  %v101 = vld [vmem:[#allocation2 + $0x98] sm:$0xff]
  %v102 = vld [vmem:[#allocation2 + $0xa0] sm:$0xff]
  %v103 = vld [vmem:[#allocation2 + $0xa8] sm:$0xff]
  %v104 = vld [vmem:[#allocation2 + $0xb0] sm:$0xff]
  %v105 = vld [vmem:[#allocation2 + $0xb8] sm:$0xff]
  %v106 = vld [vmem:[#allocation2 + $0xc0] sm:$0xff]
  %v107 = vld [vmem:[#allocation2 + $0xc8] sm:$0xff]
  %v108 = vld [vmem:[#allocation2 + $0xd0] sm:$0xff]
  %v109 = vld [vmem:[#allocation2 + $0xd8] sm:$0xff]
  %v110 = vld [vmem:[#allocation2 + $0xe0] sm:$0xff]
  %v111 = vld [vmem:[#allocation2 + $0xe8] sm:$0xff]
  %v112 = vld [vmem:[#allocation2 + $0xf0] sm:$0xff]
  %v113 = vld [vmem:[#allocation2 + $0xf8] sm:$0xff]
  %v114 = vld [vmem:[#allocation2 + $0x100] sm:$0xff]
  %v115 = vld [vmem:[#allocation2 + $0x108] sm:$0xff]
  %v116 = vld [vmem:[#allocation2 + $0x110] sm:$0xff]
  %v117 = vld [vmem:[#allocation2 + $0x118] sm:$0xff]
  %v118 = vld [vmem:[#allocation2 + $0x120] sm:$0xff]
  %v119 = vld [vmem:[#allocation2 + $0x128] sm:$0xff]
  %v120 = vld [vmem:[#allocation2 + $0x130] sm:$0xff]
  %v121 = vld [vmem:[#allocation2 + $0x138] sm:$0xff]
  %v122 = vld [vmem:[#allocation2 + $0x140] sm:$0xff]
  %v123 = vld [vmem:[#allocation2 + $0x148] sm:$0xff]
  %v124 = vld [vmem:[#allocation2 + $0x150] sm:$0xff]
  %v125 = vld [vmem:[#allocation2 + $0x158] sm:$0xff]
  %v126 = vld [vmem:[#allocation2 + $0x160] sm:$0xff]
  %v127 = vld [vmem:[#allocation2 + $0x168] sm:$0xff]
  %v128 = vld [vmem:[#allocation2 + $0x170] sm:$0xff]
  %v129 = vld [vmem:[#allocation2 + $0x178] sm:$0xff]
  %v130 = vld [vmem:[#allocation2 + $0x180] sm:$0xff]
  %v131 = vld [vmem:[#allocation2 + $0x188] sm:$0xff]
  %v132 = vld [vmem:[#allocation2 + $0x190] sm:$0xff]
  %v133 = vld [vmem:[#allocation2 + $0x198] sm:$0xff]
  %v134 = vld [vmem:[#allocation2 + $0x1a0] sm:$0xff]
  %v135 = vld [vmem:[#allocation2 + $0x1a8] sm:$0xff]
  %v136 = vld [vmem:[#allocation2 + $0x1b0] sm:$0xff]
  %v137 = vld [vmem:[#allocation2 + $0x1b8] sm:$0xff]
  %v138 = vld [vmem:[#allocation2 + $0x1c0] sm:$0xff]
  %v139 = vld [vmem:[#allocation2 + $0x1c8] sm:$0xff]
  %v140 = vld [vmem:[#allocation2 + $0x1d0] sm:$0xff]
  %v141 = vld [vmem:[#allocation2 + $0x1d8] sm:$0xff]
  %v142 = vld [vmem:[#allocation2 + $0x1e0] sm:$0xff]
  %v143 = vld [vmem:[#allocation2 + $0x1e8] sm:$0xff]
  %v144 = vld [vmem:[#allocation2 + $0x1f0] sm:$0xff]
  %v145 = vld [vmem:[#allocation2 + $0x1f8] sm:$0xff]
  %v146 = vld [vmem:[%s0] sm:$0xf]
  %v147 = vld [vmem:[%s0 + $0x4] sm:$0xf]
  %v148 = vld [vmem:[%s0 + $0x8] sm:$0xf]
  %v149 = vld [vmem:[%s0 + $0xc] sm:$0xf]
  %v150 = vld [vmem:[%s0 + $0x10] sm:$0xf]
  %v151 = vld [vmem:[%s0 + $0x14] sm:$0xf]
  %v152 = vld [vmem:[%s0 + $0x18] sm:$0xf]
  %v153 = vld [vmem:[%s0 + $0x1c] sm:$0xf]
  %v154 = vld [vmem:[%s0 + $0x20] sm:$0xf]
  %v155 = vld [vmem:[%s0 + $0x24] sm:$0xf]
  %v156 = vld [vmem:[%s0 + $0x28] sm:$0xf]
  %v157 = vld [vmem:[%s0 + $0x2c] sm:$0xf]
  %v158 = vld [vmem:[%s0 + $0x30] sm:$0xf]
  %v159 = vld [vmem:[%s0 + $0x34] sm:$0xf]
  %v160 = vld [vmem:[%s0 + $0x38] sm:$0xf]
  %v161 = vld [vmem:[%s0 + $0x3c] sm:$0xf]
  %v162 = vld [vmem:[%s0 + $0x40] sm:$0xf]
  %v163 = vld [vmem:[%s0 + $0x44] sm:$0xf]
  %v164 = vld [vmem:[%s0 + $0x48] sm:$0xf]
  %v165 = vld [vmem:[%s0 + $0x4c] sm:$0xf]
  %v166 = vld [vmem:[%s0 + $0x50] sm:$0xf]
  %v167 = vld [vmem:[%s0 + $0x54] sm:$0xf]
  %v168 = vld [vmem:[%s0 + $0x58] sm:$0xf]
  %v169 = vld [vmem:[%s0 + $0x5c] sm:$0xf]
  %v170 = vld [vmem:[%s0 + $0x60] sm:$0xf]
  %v171 = vld [vmem:[%s0 + $0x64] sm:$0xf]
  %v172 = vld [vmem:[%s0 + $0x68] sm:$0xf]
  %v173 = vld [vmem:[%s0 + $0x6c] sm:$0xf]
  %v174 = vld [vmem:[%s0 + $0x70] sm:$0xf]
  %v175 = vld [vmem:[%s0 + $0x74] sm:$0xf]
  %v176 = vld [vmem:[%s0 + $0x78] sm:$0xf]
  %v177 = vld [vmem:[%s0 + $0x7c] sm:$0xf]
  %v178 = vld [vmem:[%s0 + $0x80] sm:$0xf]
  %v179 = vld [vmem:[%s0 + $0x84] sm:$0xf]
  %v180 = vld [vmem:[%s0 + $0x88] sm:$0xf]
  %v181 = vld [vmem:[%s0 + $0x8c] sm:$0xf]
  %v182 = vld [vmem:[%s0 + $0x90] sm:$0xf]
  %v183 = vld [vmem:[%s0 + $0x94] sm:$0xf]
  %v184 = vld [vmem:[%s0 + $0x98] sm:$0xf]
  %v185 = vld [vmem:[%s0 + $0x9c] sm:$0xf]
  %v186 = vld [vmem:[%s0 + $0xa0] sm:$0xf]
  %v187 = vld [vmem:[%s0 + $0xa4] sm:$0xf]
  %v188 = vld [vmem:[%s0 + $0xa8] sm:$0xf]
  %v189 = vld [vmem:[%s0 + $0xac] sm:$0xf]
  %v190 = vld [vmem:[%s0 + $0xb0] sm:$0xf]
  %v191 = vld [vmem:[%s0 + $0xb4] sm:$0xf]
  %v192 = vld [vmem:[%s0 + $0xb8] sm:$0xf]
  %v193 = vld [vmem:[%s0 + $0xbc] sm:$0xf]
  %v194 = vld [vmem:[%s0 + $0xc0] sm:$0xf]
  %v195 = vld [vmem:[%s0 + $0xc4] sm:$0xf]
  %v196 = vld [vmem:[%s0 + $0xc8] sm:$0xf]
  %v197 = vld [vmem:[%s0 + $0xcc] sm:$0xf]
  %v198 = vld [vmem:[%s0 + $0xd0] sm:$0xf]
  %v199 = vld [vmem:[%s0 + $0xd4] sm:$0xf]
  %v200 = vld [vmem:[%s0 + $0xd8] sm:$0xf]
  %v201 = vld [vmem:[%s0 + $0xdc] sm:$0xf]
  %v202 = vld [vmem:[%s0 + $0xe0] sm:$0xf]
  %v203 = vld [vmem:[%s0 + $0xe4] sm:$0xf]
  %v204 = vld [vmem:[%s0 + $0xe8] sm:$0xf]
  %v205 = vld [vmem:[%s0 + $0xec] sm:$0xf]
  %v206 = vld [vmem:[%s0 + $0xf0] sm:$0xf]
  %v207 = vld [vmem:[%s0 + $0xf4] sm:$0xf]
  %v208 = vld [vmem:[%s0 + $0xf8] sm:$0xf]
  %v209 = vld [vmem:[%s0 + $0xfc] sm:$0xf]
  %v210 = vld [vmem:[%s1] sm:$0xf]
  %v211 = vld [vmem:[%s1 + $0x4] sm:$0xf]
  %v212 = vld [vmem:[%s1 + $0x8] sm:$0xf]
  %v213 = vld [vmem:[%s1 + $0xc] sm:$0xf]
  %v214 = vld [vmem:[%s1 + $0x10] sm:$0xf]
  %v215 = vld [vmem:[%s1 + $0x14] sm:$0xf]
  %v216 = vld [vmem:[%s1 + $0x18] sm:$0xf]
  %v217 = vld [vmem:[%s1 + $0x1c] sm:$0xf]
  %v218 = vld [vmem:[%s1 + $0x20] sm:$0xf]
  %v219 = vld [vmem:[%s1 + $0x24] sm:$0xf]
  %v220 = vld [vmem:[%s1 + $0x28] sm:$0xf]
  %v221 = vld [vmem:[%s1 + $0x2c] sm:$0xf]
  %v222 = vld [vmem:[%s1 + $0x30] sm:$0xf]
  %v223 = vld [vmem:[%s1 + $0x34] sm:$0xf]
  %v224 = vld [vmem:[%s1 + $0x38] sm:$0xf]
  %v225 = vld [vmem:[%s1 + $0x3c] sm:$0xf]
  %v290 = vunpack.c.l.b16 %v146
  %v291 = vunpack.c.l.b16 %v147
  %v292 = vunpack.c.l.b16 %v148
  %v293 = vunpack.c.l.b16 %v149
  %v294 = vunpack.c.l.b16 %v150
  %v295 = vunpack.c.l.b16 %v151
  %v296 = vunpack.c.l.b16 %v152
  %v297 = vunpack.c.l.b16 %v153
  %v298 = vunpack.c.l.b16 %v154
  %v299 = vunpack.c.l.b16 %v155
  %v300 = vunpack.c.l.b16 %v156
  %v301 = vunpack.c.l.b16 %v157
  %v302 = vunpack.c.l.b16 %v158
  %v303 = vunpack.c.l.b16 %v159
  %v304 = vunpack.c.l.b16 %v160
  %v305 = vunpack.c.l.b16 %v161
  %v306 = vunpack.c.l.b16 %v162
  %v307 = vunpack.c.l.b16 %v163
  %v308 = vunpack.c.l.b16 %v164
  %v309 = vunpack.c.l.b16 %v165
  %v310 = vunpack.c.l.b16 %v166
  %v311 = vunpack.c.l.b16 %v167
  %v312 = vunpack.c.l.b16 %v168
  %v313 = vunpack.c.l.b16 %v169
  %v314 = vunpack.c.l.b16 %v170
  %v315 = vunpack.c.l.b16 %v171
  %v316 = vunpack.c.l.b16 %v172
  %v317 = vunpack.c.l.b16 %v173
  %v318 = vunpack.c.l.b16 %v174
  %v319 = vunpack.c.l.b16 %v175
  %v320 = vunpack.c.l.b16 %v176
  %v321 = vunpack.c.l.b16 %v177
  %v322 = vunpack.c.l.b16 %v178
  %v323 = vunpack.c.l.b16 %v179
  %v324 = vunpack.c.l.b16 %v180
  %v325 = vunpack.c.l.b16 %v181
  %v326 = vunpack.c.l.b16 %v182
  %v327 = vunpack.c.l.b16 %v183
  %v328 = vunpack.c.l.b16 %v184
  %v329 = vunpack.c.l.b16 %v185
  %v330 = vunpack.c.l.b16 %v186
  %v331 = vunpack.c.l.b16 %v187
  %v332 = vunpack.c.l.b16 %v188
  %v333 = vunpack.c.l.b16 %v189
  %v334 = vunpack.c.l.b16 %v190
  %v335 = vunpack.c.l.b16 %v191
  %v336 = vunpack.c.l.b16 %v192
  %v337 = vunpack.c.l.b16 %v193
  %v338 = vunpack.c.l.b16 %v194
  %v339 = vunpack.c.l.b16 %v195
  %v340 = vunpack.c.l.b16 %v196
  %v341 = vunpack.c.l.b16 %v197
  %v342 = vunpack.c.l.b16 %v198
  %v343 = vunpack.c.l.b16 %v199
  %v344 = vunpack.c.l.b16 %v200
  %v345 = vunpack.c.l.b16 %v201
  %v346 = vunpack.c.l.b16 %v202
  %v347 = vunpack.c.l.b16 %v203
  %v348 = vunpack.c.l.b16 %v204
  %v349 = vunpack.c.l.b16 %v205
  %v350 = vunpack.c.l.b16 %v206
  %v351 = vunpack.c.l.b16 %v207
  %v352 = vunpack.c.l.b16 %v208
  %v353 = vunpack.c.l.b16 %v209
  %v354 = vpack.c.b16 %v291, %v290
  %v355 = vpack.c.b16 %v293, %v292
  %v356 = vpack.c.b16 %v295, %v294
  %v357 = vpack.c.b16 %v297, %v296
  %v358 = vpack.c.b16 %v299, %v298
  %v359 = vpack.c.b16 %v301, %v300
  %v360 = vpack.c.b16 %v303, %v302
  %v361 = vpack.c.b16 %v305, %v304
  %v362 = vpack.c.b16 %v307, %v306
  %v363 = vpack.c.b16 %v309, %v308
  %v364 = vpack.c.b16 %v311, %v310
  %v365 = vpack.c.b16 %v313, %v312
  %v366 = vpack.c.b16 %v315, %v314
  %v367 = vpack.c.b16 %v317, %v316
  %v368 = vpack.c.b16 %v319, %v318
  %v369 = vpack.c.b16 %v321, %v320
  %v370 = vpack.c.b16 %v323, %v322
  %v371 = vpack.c.b16 %v325, %v324
  %v372 = vpack.c.b16 %v327, %v326
  %v373 = vpack.c.b16 %v329, %v328
  %v374 = vpack.c.b16 %v331, %v330
  %v375 = vpack.c.b16 %v333, %v332
  %v376 = vpack.c.b16 %v335, %v334
  %v377 = vpack.c.b16 %v337, %v336
  %v378 = vpack.c.b16 %v339, %v338
  %v379 = vpack.c.b16 %v341, %v340
  %v380 = vpack.c.b16 %v343, %v342
  %v381 = vpack.c.b16 %v345, %v344
  %v382 = vpack.c.b16 %v347, %v346
  %v383 = vpack.c.b16 %v349, %v348
  %v384 = vpack.c.b16 %v351, %v350
  %v385 = vpack.c.b16 %v353, %v352
  %v434 = vunpack.c.l.b16 %v210
  %v435 = vunpack.c.l.b16 %v211
  %v436 = vunpack.c.l.b16 %v212
  %v437 = vunpack.c.l.b16 %v213
  %v438 = vunpack.c.l.b16 %v214
  %v439 = vunpack.c.l.b16 %v215
  %v440 = vunpack.c.l.b16 %v216
  %v441 = vunpack.c.l.b16 %v217
  %v442 = vunpack.c.l.b16 %v218
  %v443 = vunpack.c.l.b16 %v219
  %v444 = vunpack.c.l.b16 %v220
  %v445 = vunpack.c.l.b16 %v221
  %v446 = vunpack.c.l.b16 %v222
  %v447 = vunpack.c.l.b16 %v223
  %v448 = vunpack.c.l.b16 %v224
  %v449 = vunpack.c.l.b16 %v225
  %v450 = vpack.c.b16 %v435, %v434
  %v451 = vpack.c.b16 %v437, %v436
  %v452 = vpack.c.b16 %v439, %v438
  %v453 = vpack.c.b16 %v441, %v440
  %v454 = vpack.c.b16 %v443, %v442
  %v455 = vpack.c.b16 %v445, %v444
  %v456 = vpack.c.b16 %v447, %v446
  %v457 = vpack.c.b16 %v449, %v448
  %466 = vmatpush.bf16.msra.mxu0 %v457
  %467 = vmatpush.bf16.msra.mxu0 %v456
  %468 = vmatpush.bf16.msra.mxu0 %v455
  %469 = vmatpush.bf16.msra.mxu0 %v454
  %470 = vmatpush.bf16.msra.mxu0 %v453
  %471 = vmatpush.bf16.msra.mxu0 %v452
  %472 = vmatpush.bf16.msra.mxu0 %v451
  %473 = vmatpush.bf16.msra.mxu0 %v450
  %474 = vmatmul.bf16.gmra.mxu0 %v354
  %v475 = vpop.f32.mrf.mxu0
  %v476 = vadd.f32 0.0, %v475
  %v477 = vpop.f32.mrf.mxu0
  %v478 = vadd.f32 0.0, %v477
  %479 = vmatmul.bf16.gmra.mxu0 %v355
  %v480 = vpop.f32.mrf.mxu0
  %v481 = vadd.f32 0.0, %v480
  %v482 = vpop.f32.mrf.mxu0
  %v483 = vadd.f32 0.0, %v482
  %484 = vmatmul.bf16.gmra.mxu0 %v356
  %v485 = vpop.f32.mrf.mxu0
  %v486 = vadd.f32 0.0, %v485
  %v487 = vpop.f32.mrf.mxu0
  %v488 = vadd.f32 0.0, %v487
  %489 = vmatmul.bf16.gmra.mxu0 %v357
  %v490 = vpop.f32.mrf.mxu0
  %v491 = vadd.f32 0.0, %v490
  %v492 = vpop.f32.mrf.mxu0
  %v493 = vadd.f32 0.0, %v492
  %494 = vmatmul.bf16.gmra.mxu0 %v358
  %v495 = vpop.f32.mrf.mxu0
  %v496 = vadd.f32 0.0, %v495
  %v497 = vpop.f32.mrf.mxu0
  %v498 = vadd.f32 0.0, %v497
  %499 = vmatmul.bf16.gmra.mxu0 %v359
  %v500 = vpop.f32.mrf.mxu0
  %v501 = vadd.f32 0.0, %v500
  %v502 = vpop.f32.mrf.mxu0
  %v503 = vadd.f32 0.0, %v502
  %504 = vmatmul.bf16.gmra.mxu0 %v360
  %v505 = vpop.f32.mrf.mxu0
  %v506 = vadd.f32 0.0, %v505
  %v507 = vpop.f32.mrf.mxu0
  %v508 = vadd.f32 0.0, %v507
  %509 = vmatmul.bf16.gmra.mxu0 %v361
  %v510 = vpop.f32.mrf.mxu0
  %v511 = vadd.f32 0.0, %v510
  %v512 = vpop.f32.mrf.mxu0
  %v513 = vadd.f32 0.0, %v512
  %514 = vmatmul.bf16.gmra.mxu0 %v362
  %v515 = vpop.f32.mrf.mxu0
  %v516 = vadd.f32 0.0, %v515
  %v517 = vpop.f32.mrf.mxu0
  %v518 = vadd.f32 0.0, %v517
  %519 = vmatmul.bf16.gmra.mxu0 %v363
  %v520 = vpop.f32.mrf.mxu0
  %v521 = vadd.f32 0.0, %v520
  %v522 = vpop.f32.mrf.mxu0
  %v523 = vadd.f32 0.0, %v522
  %524 = vmatmul.bf16.gmra.mxu0 %v364
  %v525 = vpop.f32.mrf.mxu0
  %v526 = vadd.f32 0.0, %v525
  %v527 = vpop.f32.mrf.mxu0
  %v528 = vadd.f32 0.0, %v527
  %529 = vmatmul.bf16.gmra.mxu0 %v365
  %v530 = vpop.f32.mrf.mxu0
  %v531 = vadd.f32 0.0, %v530
  %v532 = vpop.f32.mrf.mxu0
  %v533 = vadd.f32 0.0, %v532
  %534 = vmatmul.bf16.gmra.mxu0 %v366
  %v535 = vpop.f32.mrf.mxu0
  %v536 = vadd.f32 0.0, %v535
  %v537 = vpop.f32.mrf.mxu0
  %v538 = vadd.f32 0.0, %v537
  %539 = vmatmul.bf16.gmra.mxu0 %v367
  %v540 = vpop.f32.mrf.mxu0
  %v541 = vadd.f32 0.0, %v540
  %v542 = vpop.f32.mrf.mxu0
  %v543 = vadd.f32 0.0, %v542
  %544 = vmatmul.bf16.gmra.mxu0 %v368
  %v545 = vpop.f32.mrf.mxu0
  %v546 = vadd.f32 0.0, %v545
  %v547 = vpop.f32.mrf.mxu0
  %v548 = vadd.f32 0.0, %v547
  %549 = vmatmul.bf16.gmra.mxu0 %v369
  %v550 = vpop.f32.mrf.mxu0
  %v551 = vadd.f32 0.0, %v550
  %v552 = vpop.f32.mrf.mxu0
  %v553 = vadd.f32 0.0, %v552
  %554 = vmatmul.bf16.gmra.mxu0 %v370
  %v555 = vpop.f32.mrf.mxu0
  %v556 = vadd.f32 0.0, %v555
  %v557 = vpop.f32.mrf.mxu0
  %v558 = vadd.f32 0.0, %v557
  %559 = vmatmul.bf16.gmra.mxu0 %v371
  %v560 = vpop.f32.mrf.mxu0
  %v561 = vadd.f32 0.0, %v560
  %v562 = vpop.f32.mrf.mxu0
  %v563 = vadd.f32 0.0, %v562
  %564 = vmatmul.bf16.gmra.mxu0 %v372
  %v565 = vpop.f32.mrf.mxu0
  %v566 = vadd.f32 0.0, %v565
  %v567 = vpop.f32.mrf.mxu0
  %v568 = vadd.f32 0.0, %v567
  %569 = vmatmul.bf16.gmra.mxu0 %v373
  %v570 = vpop.f32.mrf.mxu0
  %v571 = vadd.f32 0.0, %v570
  %v572 = vpop.f32.mrf.mxu0
  %v573 = vadd.f32 0.0, %v572
  %574 = vmatmul.bf16.gmra.mxu0 %v374
  %v575 = vpop.f32.mrf.mxu0
  %v576 = vadd.f32 0.0, %v575
  %v577 = vpop.f32.mrf.mxu0
  %v578 = vadd.f32 0.0, %v577
  %579 = vmatmul.bf16.gmra.mxu0 %v375
  %v580 = vpop.f32.mrf.mxu0
  %v581 = vadd.f32 0.0, %v580
  %v582 = vpop.f32.mrf.mxu0
  %v583 = vadd.f32 0.0, %v582
  %584 = vmatmul.bf16.gmra.mxu0 %v376
  %v585 = vpop.f32.mrf.mxu0
  %v586 = vadd.f32 0.0, %v585
  %v587 = vpop.f32.mrf.mxu0
  %v588 = vadd.f32 0.0, %v587
  %589 = vmatmul.bf16.gmra.mxu0 %v377
  %v590 = vpop.f32.mrf.mxu0
  %v591 = vadd.f32 0.0, %v590
  %v592 = vpop.f32.mrf.mxu0
  %v593 = vadd.f32 0.0, %v592
  %594 = vmatmul.bf16.gmra.mxu0 %v378
  %v595 = vpop.f32.mrf.mxu0
  %v596 = vadd.f32 0.0, %v595
  %v597 = vpop.f32.mrf.mxu0
  %v598 = vadd.f32 0.0, %v597
  %599 = vmatmul.bf16.gmra.mxu0 %v379
  %v600 = vpop.f32.mrf.mxu0
  %v601 = vadd.f32 0.0, %v600
  %v602 = vpop.f32.mrf.mxu0
  %v603 = vadd.f32 0.0, %v602
  %604 = vmatmul.bf16.gmra.mxu0 %v380
  %v605 = vpop.f32.mrf.mxu0
  %v606 = vadd.f32 0.0, %v605
  %v607 = vpop.f32.mrf.mxu0
  %v608 = vadd.f32 0.0, %v607
  %609 = vmatmul.bf16.gmra.mxu0 %v381
  %v610 = vpop.f32.mrf.mxu0
  %v611 = vadd.f32 0.0, %v610
  %v612 = vpop.f32.mrf.mxu0
  %v613 = vadd.f32 0.0, %v612
  %614 = vmatmul.bf16.gmra.mxu0 %v382
  %v615 = vpop.f32.mrf.mxu0
  %v616 = vadd.f32 0.0, %v615
  %v617 = vpop.f32.mrf.mxu0
  %v618 = vadd.f32 0.0, %v617
  %619 = vmatmul.bf16.gmra.mxu0 %v383
  %v620 = vpop.f32.mrf.mxu0
  %v621 = vadd.f32 0.0, %v620
  %v622 = vpop.f32.mrf.mxu0
  %v623 = vadd.f32 0.0, %v622
  %624 = vmatmul.bf16.gmra.mxu0 %v384
  %v625 = vpop.f32.mrf.mxu0
  %v626 = vadd.f32 0.0, %v625
  %v627 = vpop.f32.mrf.mxu0
  %v628 = vadd.f32 0.0, %v627
  %629 = vmatmul.bf16.gmra.mxu0 %v385
  %v630 = vpop.f32.mrf.mxu0
  %v631 = vadd.f32 0.0, %v630
  %v632 = vpop.f32.mrf.mxu0
  %v633 = vadd.f32 0.0, %v632
  %634 = vdwg.mxu0
  %v635 = vadd.f32 %v82, %v476
  %v636 = vadd.f32 %v83, %v478
  %v637 = vadd.f32 %v84, %v481
  %v638 = vadd.f32 %v85, %v483
  %v639 = vadd.f32 %v86, %v486
  %v640 = vadd.f32 %v87, %v488
  %v641 = vadd.f32 %v88, %v491
  %v642 = vadd.f32 %v89, %v493
  %v643 = vadd.f32 %v90, %v496
  %v644 = vadd.f32 %v91, %v498
  %v645 = vadd.f32 %v92, %v501
  %v646 = vadd.f32 %v93, %v503
  %v647 = vadd.f32 %v94, %v506
  %v648 = vadd.f32 %v95, %v508
  %v649 = vadd.f32 %v96, %v511
  %v650 = vadd.f32 %v97, %v513
  %v651 = vadd.f32 %v98, %v516
  %v652 = vadd.f32 %v99, %v518
  %v653 = vadd.f32 %v100, %v521
  %v654 = vadd.f32 %v101, %v523
  %v655 = vadd.f32 %v102, %v526
  %v656 = vadd.f32 %v103, %v528
  %v657 = vadd.f32 %v104, %v531
  %v658 = vadd.f32 %v105, %v533
  %v659 = vadd.f32 %v106, %v536
  %v660 = vadd.f32 %v107, %v538
  %v661 = vadd.f32 %v108, %v541
  %v662 = vadd.f32 %v109, %v543
  %v663 = vadd.f32 %v110, %v546
  %v664 = vadd.f32 %v111, %v548
  %v665 = vadd.f32 %v112, %v551
  %v666 = vadd.f32 %v113, %v553
  %v667 = vadd.f32 %v114, %v556
  %v668 = vadd.f32 %v115, %v558
  %v669 = vadd.f32 %v116, %v561
  %v670 = vadd.f32 %v117, %v563
  %v671 = vadd.f32 %v118, %v566
  %v672 = vadd.f32 %v119, %v568
  %v673 = vadd.f32 %v120, %v571
  %v674 = vadd.f32 %v121, %v573
  %v675 = vadd.f32 %v122, %v576
  %v676 = vadd.f32 %v123, %v578
  %v677 = vadd.f32 %v124, %v581
  %v678 = vadd.f32 %v125, %v583
  %v679 = vadd.f32 %v126, %v586
  %v680 = vadd.f32 %v127, %v588
  %v681 = vadd.f32 %v128, %v591
  %v682 = vadd.f32 %v129, %v593
  %v683 = vadd.f32 %v130, %v596
  %v684 = vadd.f32 %v131, %v598
  %v685 = vadd.f32 %v132, %v601
  %v686 = vadd.f32 %v133, %v603
  %v687 = vadd.f32 %v134, %v606
  %v688 = vadd.f32 %v135, %v608
  %v689 = vadd.f32 %v136, %v611
  %v690 = vadd.f32 %v137, %v613
  %v691 = vadd.f32 %v138, %v616
  %v692 = vadd.f32 %v139, %v618
  %v693 = vadd.f32 %v140, %v621
  %v694 = vadd.f32 %v141, %v623
  %v695 = vadd.f32 %v142, %v626
  %v696 = vadd.f32 %v143, %v628
  %v697 = vadd.f32 %v144, %v631
  %v698 = vadd.f32 %v145, %v633
  %699 = vst [vmem:[#allocation2] sm:$0xff] %v635
  %700 = vst [vmem:[#allocation2 + $0x8] sm:$0xff] %v636
  %701 = vst [vmem:[#allocation2 + $0x10] sm:$0xff] %v637
  %702 = vst [vmem:[#allocation2 + $0x18] sm:$0xff] %v638
  %703 = vst [vmem:[#allocation2 + $0x20] sm:$0xff] %v639
  %704 = vst [vmem:[#allocation2 + $0x28] sm:$0xff] %v640
  %705 = vst [vmem:[#allocation2 + $0x30] sm:$0xff] %v641
  %706 = vst [vmem:[#allocation2 + $0x38] sm:$0xff] %v642
  %707 = vst [vmem:[#allocation2 + $0x40] sm:$0xff] %v643
  %708 = vst [vmem:[#allocation2 + $0x48] sm:$0xff] %v644
  %709 = vst [vmem:[#allocation2 + $0x50] sm:$0xff] %v645
  %710 = vst [vmem:[#allocation2 + $0x58] sm:$0xff] %v646
  %711 = vst [vmem:[#allocation2 + $0x60] sm:$0xff] %v647
  %712 = vst [vmem:[#allocation2 + $0x68] sm:$0xff] %v648
  %713 = vst [vmem:[#allocation2 + $0x70] sm:$0xff] %v649
  %714 = vst [vmem:[#allocation2 + $0x78] sm:$0xff] %v650
  %715 = vst [vmem:[#allocation2 + $0x80] sm:$0xff] %v651
  %716 = vst [vmem:[#allocation2 + $0x88] sm:$0xff] %v652
  %717 = vst [vmem:[#allocation2 + $0x90] sm:$0xff] %v653
  %718 = vst [vmem:[#allocation2 + $0x98] sm:$0xff] %v654
  %719 = vst [vmem:[#allocation2 + $0xa0] sm:$0xff] %v655
  %720 = vst [vmem:[#allocation2 + $0xa8] sm:$0xff] %v656
  %721 = vst [vmem:[#allocation2 + $0xb0] sm:$0xff] %v657
  %722 = vst [vmem:[#allocation2 + $0xb8] sm:$0xff] %v658
  %723 = vst [vmem:[#allocation2 + $0xc0] sm:$0xff] %v659
  %724 = vst [vmem:[#allocation2 + $0xc8] sm:$0xff] %v660
  %725 = vst [vmem:[#allocation2 + $0xd0] sm:$0xff] %v661
  %726 = vst [vmem:[#allocation2 + $0xd8] sm:$0xff] %v662
  %727 = vst [vmem:[#allocation2 + $0xe0] sm:$0xff] %v663
  %728 = vst [vmem:[#allocation2 + $0xe8] sm:$0xff] %v664
  %729 = vst [vmem:[#allocation2 + $0xf0] sm:$0xff] %v665
  %730 = vst [vmem:[#allocation2 + $0xf8] sm:$0xff] %v666
  %731 = vst [vmem:[#allocation2 + $0x100] sm:$0xff] %v667
  %732 = vst [vmem:[#allocation2 + $0x108] sm:$0xff] %v668
  %733 = vst [vmem:[#allocation2 + $0x110] sm:$0xff] %v669
  %734 = vst [vmem:[#allocation2 + $0x118] sm:$0xff] %v670
  %735 = vst [vmem:[#allocation2 + $0x120] sm:$0xff] %v671
  %736 = vst [vmem:[#allocation2 + $0x128] sm:$0xff] %v672
  %737 = vst [vmem:[#allocation2 + $0x130] sm:$0xff] %v673
  %738 = vst [vmem:[#allocation2 + $0x138] sm:$0xff] %v674
  %739 = vst [vmem:[#allocation2 + $0x140] sm:$0xff] %v675
  %740 = vst [vmem:[#allocation2 + $0x148] sm:$0xff] %v676
  %741 = vst [vmem:[#allocation2 + $0x150] sm:$0xff] %v677
  %742 = vst [vmem:[#allocation2 + $0x158] sm:$0xff] %v678
  %743 = vst [vmem:[#allocation2 + $0x160] sm:$0xff] %v679
  %744 = vst [vmem:[#allocation2 + $0x168] sm:$0xff] %v680
  %745 = vst [vmem:[#allocation2 + $0x170] sm:$0xff] %v681
  %746 = vst [vmem:[#allocation2 + $0x178] sm:$0xff] %v682
  %747 = vst [vmem:[#allocation2 + $0x180] sm:$0xff] %v683
  %748 = vst [vmem:[#allocation2 + $0x188] sm:$0xff] %v684
  %749 = vst [vmem:[#allocation2 + $0x190] sm:$0xff] %v685
  %750 = vst [vmem:[#allocation2 + $0x198] sm:$0xff] %v686
  %751 = vst [vmem:[#allocation2 + $0x1a0] sm:$0xff] %v687
  %752 = vst [vmem:[#allocation2 + $0x1a8] sm:$0xff] %v688
  %753 = vst [vmem:[#allocation2 + $0x1b0] sm:$0xff] %v689
  %754 = vst [vmem:[#allocation2 + $0x1b8] sm:$0xff] %v690
  %755 = vst [vmem:[#allocation2 + $0x1c0] sm:$0xff] %v691
  %756 = vst [vmem:[#allocation2 + $0x1c8] sm:$0xff] %v692
  %757 = vst [vmem:[#allocation2 + $0x1d0] sm:$0xff] %v693
  %758 = vst [vmem:[#allocation2 + $0x1d8] sm:$0xff] %v694
  %759 = vst [vmem:[#allocation2 + $0x1e0] sm:$0xff] %v695
  %760 = vst [vmem:[#allocation2 + $0x1e8] sm:$0xff] %v696
  %761 = vst [vmem:[#allocation2 + $0x1f0] sm:$0xff] %v697
  %762 = vst [vmem:[#allocation2 + $0x1f8] sm:$0xff] %v698
  // Predicated region
  $region14: #{_lambda_.4} parent=0 // pred_check
    %p763 = pneg %p14
  $region15: #{_lambda_.4} parent=0 // pred_check_branch
    %765 = sbr.rel (%p763) target = $region17
  $region16: #{_lambda_.4} parent=0 // pred_region
    %v766 = vld [vmem:[#allocation2] sm:$0xff]
    %v767 = vld [vmem:[#allocation2 + $0x8] sm:$0xff]
    %v768 = vld [vmem:[#allocation2 + $0x10] sm:$0xff]
    %v769 = vld [vmem:[#allocation2 + $0x18] sm:$0xff]
    %v770 = vld [vmem:[#allocation2 + $0x20] sm:$0xff]
    %v771 = vld [vmem:[#allocation2 + $0x28] sm:$0xff]
    %v772 = vld [vmem:[#allocation2 + $0x30] sm:$0xff]
    %v773 = vld [vmem:[#allocation2 + $0x38] sm:$0xff]
    %v774 = vld [vmem:[#allocation2 + $0x40] sm:$0xff]
    %v775 = vld [vmem:[#allocation2 + $0x48] sm:$0xff]
    %v776 = vld [vmem:[#allocation2 + $0x50] sm:$0xff]
    %v777 = vld [vmem:[#allocation2 + $0x58] sm:$0xff]
    %v778 = vld [vmem:[#allocation2 + $0x60] sm:$0xff]
    %v779 = vld [vmem:[#allocation2 + $0x68] sm:$0xff]
    %v780 = vld [vmem:[#allocation2 + $0x70] sm:$0xff]
    %v781 = vld [vmem:[#allocation2 + $0x78] sm:$0xff]
    %v782 = vld [vmem:[#allocation2 + $0x80] sm:$0xff]
    %v783 = vld [vmem:[#allocation2 + $0x88] sm:$0xff]
    %v784 = vld [vmem:[#allocation2 + $0x90] sm:$0xff]
    %v785 = vld [vmem:[#allocation2 + $0x98] sm:$0xff]
    %v786 = vld [vmem:[#allocation2 + $0xa0] sm:$0xff]
    %v787 = vld [vmem:[#allocation2 + $0xa8] sm:$0xff]
    %v788 = vld [vmem:[#allocation2 + $0xb0] sm:$0xff]
    %v789 = vld [vmem:[#allocation2 + $0xb8] sm:$0xff]
    %v790 = vld [vmem:[#allocation2 + $0xc0] sm:$0xff]
    %v791 = vld [vmem:[#allocation2 + $0xc8] sm:$0xff]
    %v792 = vld [vmem:[#allocation2 + $0xd0] sm:$0xff]
    %v793 = vld [vmem:[#allocation2 + $0xd8] sm:$0xff]
    %v794 = vld [vmem:[#allocation2 + $0xe0] sm:$0xff]
    %v795 = vld [vmem:[#allocation2 + $0xe8] sm:$0xff]
    %v796 = vld [vmem:[#allocation2 + $0xf0] sm:$0xff]
    %v797 = vld [vmem:[#allocation2 + $0xf8] sm:$0xff]
    %v798 = vld [vmem:[#allocation2 + $0x100] sm:$0xff]
    %v799 = vld [vmem:[#allocation2 + $0x108] sm:$0xff]
    %v800 = vld [vmem:[#allocation2 + $0x110] sm:$0xff]
    %v801 = vld [vmem:[#allocation2 + $0x118] sm:$0xff]
    %v802 = vld [vmem:[#allocation2 + $0x120] sm:$0xff]
    %v803 = vld [vmem:[#allocation2 + $0x128] sm:$0xff]
    %v804 = vld [vmem:[#allocation2 + $0x130] sm:$0xff]
    %v805 = vld [vmem:[#allocation2 + $0x138] sm:$0xff]
    %v806 = vld [vmem:[#allocation2 + $0x140] sm:$0xff]
    %v807 = vld [vmem:[#allocation2 + $0x148] sm:$0xff]
    %v808 = vld [vmem:[#allocation2 + $0x150] sm:$0xff]
    %v809 = vld [vmem:[#allocation2 + $0x158] sm:$0xff]
    %v810 = vld [vmem:[#allocation2 + $0x160] sm:$0xff]
    %v811 = vld [vmem:[#allocation2 + $0x168] sm:$0xff]
    %v812 = vld [vmem:[#allocation2 + $0x170] sm:$0xff]
    %v813 = vld [vmem:[#allocation2 + $0x178] sm:$0xff]
    %v814 = vld [vmem:[#allocation2 + $0x180] sm:$0xff]
    %v815 = vld [vmem:[#allocation2 + $0x188] sm:$0xff]
    %v816 = vld [vmem:[#allocation2 + $0x190] sm:$0xff]
    %v817 = vld [vmem:[#allocation2 + $0x198] sm:$0xff]
    %v818 = vld [vmem:[#allocation2 + $0x1a0] sm:$0xff]
    %v819 = vld [vmem:[#allocation2 + $0x1a8] sm:$0xff]
    %v820 = vld [vmem:[#allocation2 + $0x1b0] sm:$0xff]
    %v821 = vld [vmem:[#allocation2 + $0x1b8] sm:$0xff]
    %v822 = vld [vmem:[#allocation2 + $0x1c0] sm:$0xff]
    %v823 = vld [vmem:[#allocation2 + $0x1c8] sm:$0xff]
    %v824 = vld [vmem:[#allocation2 + $0x1d0] sm:$0xff]
    %v825 = vld [vmem:[#allocation2 + $0x1d8] sm:$0xff]
    %v826 = vld [vmem:[#allocation2 + $0x1e0] sm:$0xff]
    %v827 = vld [vmem:[#allocation2 + $0x1e8] sm:$0xff]
    %v828 = vld [vmem:[#allocation2 + $0x1f0] sm:$0xff]
    %v829 = vld [vmem:[#allocation2 + $0x1f8] sm:$0xff]
    %830 = vst [vmem:[%s2] sm:$0xff] %v766
    %831 = vst [vmem:[%s2 + $0x8] sm:$0xff] %v767
    %832 = vst [vmem:[%s2 + $0x10] sm:$0xff] %v768
    %833 = vst [vmem:[%s2 + $0x18] sm:$0xff] %v769
    %834 = vst [vmem:[%s2 + $0x20] sm:$0xff] %v770
    %835 = vst [vmem:[%s2 + $0x28] sm:$0xff] %v771
    %836 = vst [vmem:[%s2 + $0x30] sm:$0xff] %v772
    %837 = vst [vmem:[%s2 + $0x38] sm:$0xff] %v773
    %838 = vst [vmem:[%s2 + $0x40] sm:$0xff] %v774
    %839 = vst [vmem:[%s2 + $0x48] sm:$0xff] %v775
    %840 = vst [vmem:[%s2 + $0x50] sm:$0xff] %v776
    %841 = vst [vmem:[%s2 + $0x58] sm:$0xff] %v777
    %842 = vst [vmem:[%s2 + $0x60] sm:$0xff] %v778
    %843 = vst [vmem:[%s2 + $0x68] sm:$0xff] %v779
    %844 = vst [vmem:[%s2 + $0x70] sm:$0xff] %v780
    %845 = vst [vmem:[%s2 + $0x78] sm:$0xff] %v781
    %846 = vst [vmem:[%s2 + $0x80] sm:$0xff] %v782
    %847 = vst [vmem:[%s2 + $0x88] sm:$0xff] %v783
    %848 = vst [vmem:[%s2 + $0x90] sm:$0xff] %v784
    %849 = vst [vmem:[%s2 + $0x98] sm:$0xff] %v785
    %850 = vst [vmem:[%s2 + $0xa0] sm:$0xff] %v786
    %851 = vst [vmem:[%s2 + $0xa8] sm:$0xff] %v787
    %852 = vst [vmem:[%s2 + $0xb0] sm:$0xff] %v788
    %853 = vst [vmem:[%s2 + $0xb8] sm:$0xff] %v789
    %854 = vst [vmem:[%s2 + $0xc0] sm:$0xff] %v790
    %855 = vst [vmem:[%s2 + $0xc8] sm:$0xff] %v791
    %856 = vst [vmem:[%s2 + $0xd0] sm:$0xff] %v792
    %857 = vst [vmem:[%s2 + $0xd8] sm:$0xff] %v793
    %858 = vst [vmem:[%s2 + $0xe0] sm:$0xff] %v794
    %859 = vst [vmem:[%s2 + $0xe8] sm:$0xff] %v795
    %860 = vst [vmem:[%s2 + $0xf0] sm:$0xff] %v796
    %861 = vst [vmem:[%s2 + $0xf8] sm:$0xff] %v797
    %862 = vst [vmem:[%s2 + $0x100] sm:$0xff] %v798
    %863 = vst [vmem:[%s2 + $0x108] sm:$0xff] %v799
    %864 = vst [vmem:[%s2 + $0x110] sm:$0xff] %v800
    %865 = vst [vmem:[%s2 + $0x118] sm:$0xff] %v801
    %866 = vst [vmem:[%s2 + $0x120] sm:$0xff] %v802
    %867 = vst [vmem:[%s2 + $0x128] sm:$0xff] %v803
    %868 = vst [vmem:[%s2 + $0x130] sm:$0xff] %v804
    %869 = vst [vmem:[%s2 + $0x138] sm:$0xff] %v805
    %870 = vst [vmem:[%s2 + $0x140] sm:$0xff] %v806
    %871 = vst [vmem:[%s2 + $0x148] sm:$0xff] %v807
    %872 = vst [vmem:[%s2 + $0x150] sm:$0xff] %v808
    %873 = vst [vmem:[%s2 + $0x158] sm:$0xff] %v809
    %874 = vst [vmem:[%s2 + $0x160] sm:$0xff] %v810
    %875 = vst [vmem:[%s2 + $0x168] sm:$0xff] %v811
    %876 = vst [vmem:[%s2 + $0x170] sm:$0xff] %v812
    %877 = vst [vmem:[%s2 + $0x178] sm:$0xff] %v813
    %878 = vst [vmem:[%s2 + $0x180] sm:$0xff] %v814
    %879 = vst [vmem:[%s2 + $0x188] sm:$0xff] %v815
    %880 = vst [vmem:[%s2 + $0x190] sm:$0xff] %v816
    %881 = vst [vmem:[%s2 + $0x198] sm:$0xff] %v817
    %882 = vst [vmem:[%s2 + $0x1a0] sm:$0xff] %v818
    %883 = vst [vmem:[%s2 + $0x1a8] sm:$0xff] %v819
    %884 = vst [vmem:[%s2 + $0x1b0] sm:$0xff] %v820
    %885 = vst [vmem:[%s2 + $0x1b8] sm:$0xff] %v821
    %886 = vst [vmem:[%s2 + $0x1c0] sm:$0xff] %v822
    %887 = vst [vmem:[%s2 + $0x1c8] sm:$0xff] %v823
    %888 = vst [vmem:[%s2 + $0x1d0] sm:$0xff] %v824
    %889 = vst [vmem:[%s2 + $0x1d8] sm:$0xff] %v825
    %890 = vst [vmem:[%s2 + $0x1e0] sm:$0xff] %v826
    %891 = vst [vmem:[%s2 + $0x1e8] sm:$0xff] %v827
    %892 = vst [vmem:[%s2 + $0x1f0] sm:$0xff] %v828
    %893 = vst [vmem:[%s2 + $0x1f8] sm:$0xff] %v829
    %v894 = vadd.f32 %v766, %v767
    %v895 = vadd.f32 %v894, %v768
    %v896 = vadd.f32 %v895, %v769
    %v897 = vadd.f32 %v896, %v770
    %v898 = vadd.f32 %v897, %v771
    %v899 = vadd.f32 %v898, %v772
    %v900 = vadd.f32 %v899, %v773
    %v901 = vadd.f32 %v900, %v774
    %v902 = vadd.f32 %v901, %v775
    %v903 = vadd.f32 %v902, %v776
    %v904 = vadd.f32 %v903, %v777
    %v905 = vadd.f32 %v904, %v778
    %v906 = vadd.f32 %v905, %v779
    %v907 = vadd.f32 %v906, %v780
    %v908 = vadd.f32 %v907, %v781
    %v909 = vadd.f32 %v908, %v782
    %v910 = vadd.f32 %v909, %v783
    %v911 = vadd.f32 %v910, %v784
    %v912 = vadd.f32 %v911, %v785
    %v913 = vadd.f32 %v912, %v786
    %v914 = vadd.f32 %v913, %v787
    %v915 = vadd.f32 %v914, %v788
    %v916 = vadd.f32 %v915, %v789
    %v917 = vadd.f32 %v916, %v790
    %v918 = vadd.f32 %v917, %v791
    %v919 = vadd.f32 %v918, %v792
    %v920 = vadd.f32 %v919, %v793
    %v921 = vadd.f32 %v920, %v794
    %v922 = vadd.f32 %v921, %v795
    %v923 = vadd.f32 %v922, %v796
    %v924 = vadd.f32 %v923, %v797
    %v925 = vadd.f32 %v924, %v798
    %v926 = vadd.f32 %v925, %v799
    %v927 = vadd.f32 %v926, %v800
    %v928 = vadd.f32 %v927, %v801
    %v929 = vadd.f32 %v928, %v802
    %v930 = vadd.f32 %v929, %v803
    %v931 = vadd.f32 %v930, %v804
    %v932 = vadd.f32 %v931, %v805
    %v933 = vadd.f32 %v932, %v806
    %v934 = vadd.f32 %v933, %v807
    %v935 = vadd.f32 %v934, %v808
    %v936 = vadd.f32 %v935, %v809
    %v937 = vadd.f32 %v936, %v810
    %v938 = vadd.f32 %v937, %v811
    %v939 = vadd.f32 %v938, %v812
    %v940 = vadd.f32 %v939, %v813
    %v941 = vadd.f32 %v940, %v814
    %v942 = vadd.f32 %v941, %v815
    %v943 = vadd.f32 %v942, %v816
    %v944 = vadd.f32 %v943, %v817
    %v945 = vadd.f32 %v944, %v818
    %v946 = vadd.f32 %v945, %v819
    %v947 = vadd.f32 %v946, %v820
    %v948 = vadd.f32 %v947, %v821
    %v949 = vadd.f32 %v948, %v822
    %v950 = vadd.f32 %v949, %v823
    %v951 = vadd.f32 %v950, %v824
    %v952 = vadd.f32 %v951, %v825
    %v953 = vadd.f32 %v952, %v826
    %v954 = vadd.f32 %v953, %v827
    %v955 = vadd.f32 %v954, %v828
    %v956 = vadd.f32 %v955, %v829
    %v957 = vrot.slane %v956, 4
    %v958 = vadd.f32 %v956, %v957
    %v959 = vrot.slane %v958, 2
    %v960 = vadd.f32 %v958, %v959
    %v961 = vrot.slane %v960, 1
    %v962 = vadd.f32 %v960, %v961
    %963 = vst [vmem:[%s3] sm:$0x1] %v962
    %v964 = vmul.f32 %v766, %v766
    %v965 = vmul.f32 %v767, %v767
    %v966 = vmul.f32 %v768, %v768
    %v967 = vmul.f32 %v769, %v769
    %v968 = vmul.f32 %v770, %v770
    %v969 = vmul.f32 %v771, %v771
    %v970 = vmul.f32 %v772, %v772
    %v971 = vmul.f32 %v773, %v773
    %v972 = vmul.f32 %v774, %v774
    %v973 = vmul.f32 %v775, %v775
    %v974 = vmul.f32 %v776, %v776
    %v975 = vmul.f32 %v777, %v777
    %v976 = vmul.f32 %v778, %v778
    %v977 = vmul.f32 %v779, %v779
    %v978 = vmul.f32 %v780, %v780
    %v979 = vmul.f32 %v781, %v781
    %v980 = vmul.f32 %v782, %v782
    %v981 = vmul.f32 %v783, %v783
    %v982 = vmul.f32 %v784, %v784
    %v983 = vmul.f32 %v785, %v785
    %v984 = vmul.f32 %v786, %v786
    %v985 = vmul.f32 %v787, %v787
    %v986 = vmul.f32 %v788, %v788
    %v987 = vmul.f32 %v789, %v789
    %v988 = vmul.f32 %v790, %v790
    %v989 = vmul.f32 %v791, %v791
    %v990 = vmul.f32 %v792, %v792
    %v991 = vmul.f32 %v793, %v793
    %v992 = vmul.f32 %v794, %v794
    %v993 = vmul.f32 %v795, %v795
    %v994 = vmul.f32 %v796, %v796
    %v995 = vmul.f32 %v797, %v797
    %v996 = vmul.f32 %v798, %v798
    %v997 = vmul.f32 %v799, %v799
    %v998 = vmul.f32 %v800, %v800
    %v999 = vmul.f32 %v801, %v801
    %v1000 = vmul.f32 %v802, %v802
    %v1001 = vmul.f32 %v803, %v803
    %v1002 = vmul.f32 %v804, %v804
    %v1003 = vmul.f32 %v805, %v805
    %v1004 = vmul.f32 %v806, %v806
    %v1005 = vmul.f32 %v807, %v807
    %v1006 = vmul.f32 %v808, %v808
    %v1007 = vmul.f32 %v809, %v809
    %v1008 = vmul.f32 %v810, %v810
    %v1009 = vmul.f32 %v811, %v811
    %v1010 = vmul.f32 %v812, %v812
    %v1011 = vmul.f32 %v813, %v813
    %v1012 = vmul.f32 %v814, %v814
    %v1013 = vmul.f32 %v815, %v815
    %v1014 = vmul.f32 %v816, %v816
    %v1015 = vmul.f32 %v817, %v817
    %v1016 = vmul.f32 %v818, %v818
    %v1017 = vmul.f32 %v819, %v819
    %v1018 = vmul.f32 %v820, %v820
    %v1019 = vmul.f32 %v821, %v821
    %v1020 = vmul.f32 %v822, %v822
    %v1021 = vmul.f32 %v823, %v823
    %v1022 = vmul.f32 %v824, %v824
    %v1023 = vmul.f32 %v825, %v825
    %v1024 = vmul.f32 %v826, %v826
    %v1025 = vmul.f32 %v827, %v827
    %v1026 = vmul.f32 %v828, %v828
    %v1027 = vmul.f32 %v829, %v829
    %v1028 = vadd.f32 %v964, %v965
    %v1029 = vadd.f32 %v1028, %v966
    %v1030 = vadd.f32 %v1029, %v967
    %v1031 = vadd.f32 %v1030, %v968
    %v1032 = vadd.f32 %v1031, %v969
    %v1033 = vadd.f32 %v1032, %v970
    %v1034 = vadd.f32 %v1033, %v971
    %v1035 = vadd.f32 %v1034, %v972
    %v1036 = vadd.f32 %v1035, %v973
    %v1037 = vadd.f32 %v1036, %v974
    %v1038 = vadd.f32 %v1037, %v975
    %v1039 = vadd.f32 %v1038, %v976
    %v1040 = vadd.f32 %v1039, %v977
    %v1041 = vadd.f32 %v1040, %v978
    %v1042 = vadd.f32 %v1041, %v979
    %v1043 = vadd.f32 %v1042, %v980
    %v1044 = vadd.f32 %v1043, %v981
    %v1045 = vadd.f32 %v1044, %v982
    %v1046 = vadd.f32 %v1045, %v983
    %v1047 = vadd.f32 %v1046, %v984
    %v1048 = vadd.f32 %v1047, %v985
    %v1049 = vadd.f32 %v1048, %v986
    %v1050 = vadd.f32 %v1049, %v987
    %v1051 = vadd.f32 %v1050, %v988
    %v1052 = vadd.f32 %v1051, %v989
    %v1053 = vadd.f32 %v1052, %v990
    %v1054 = vadd.f32 %v1053, %v991
    %v1055 = vadd.f32 %v1054, %v992
    %v1056 = vadd.f32 %v1055, %v993
    %v1057 = vadd.f32 %v1056, %v994
    %v1058 = vadd.f32 %v1057, %v995
    %v1059 = vadd.f32 %v1058, %v996
    %v1060 = vadd.f32 %v1059, %v997
    %v1061 = vadd.f32 %v1060, %v998
    %v1062 = vadd.f32 %v1061, %v999
    %v1063 = vadd.f32 %v1062, %v1000
    %v1064 = vadd.f32 %v1063, %v1001
    %v1065 = vadd.f32 %v1064, %v1002
    %v1066 = vadd.f32 %v1065, %v1003
    %v1067 = vadd.f32 %v1066, %v1004
    %v1068 = vadd.f32 %v1067, %v1005
    %v1069 = vadd.f32 %v1068, %v1006
    %v1070 = vadd.f32 %v1069, %v1007
    %v1071 = vadd.f32 %v1070, %v1008
    %v1072 = vadd.f32 %v1071, %v1009
    %v1073 = vadd.f32 %v1072, %v1010
    %v1074 = vadd.f32 %v1073, %v1011
    %v1075 = vadd.f32 %v1074, %v1012
    %v1076 = vadd.f32 %v1075, %v1013
    %v1077 = vadd.f32 %v1076, %v1014
    %v1078 = vadd.f32 %v1077, %v1015
    %v1079 = vadd.f32 %v1078, %v1016
    %v1080 = vadd.f32 %v1079, %v1017
    %v1081 = vadd.f32 %v1080, %v1018
    %v1082 = vadd.f32 %v1081, %v1019
    %v1083 = vadd.f32 %v1082, %v1020
    %v1084 = vadd.f32 %v1083, %v1021
    %v1085 = vadd.f32 %v1084, %v1022
    %v1086 = vadd.f32 %v1085, %v1023
    %v1087 = vadd.f32 %v1086, %v1024
    %v1088 = vadd.f32 %v1087, %v1025
    %v1089 = vadd.f32 %v1088, %v1026
    %v1090 = vadd.f32 %v1089, %v1027
    %v1091 = vrot.slane %v1090, 4
    %v1092 = vadd.f32 %v1090, %v1091
    %v1093 = vrot.slane %v1092, 2
    %v1094 = vadd.f32 %v1092, %v1093
    %v1095 = vrot.slane %v1094, 1
    %v1096 = vadd.f32 %v1094, %v1095
    %1097 = vst [vmem:[%s4] sm:$0x1] %v1096
  $region17: #{_lambda_.4} parent=0 // pred_fallthru
    _
  // Predicated region
  $region18: #{_lambda_.4} parent=0 // pred_check
    _
  $region19: #{_lambda_.4} parent=0 // pred_check_branch
    %1099 = sbr.rel (0) target = $region21
  $region20: #{_lambda_.4} parent=0 // pred_region
    _
  $region21: #{_lambda_.4} parent=0 // pred_fallthru
    _
  // Predicated region
  $region22: #{_lambda_.4} parent=0 // pred_check
    _
  $region23: #{_lambda_.4} parent=0 // pred_check_branch
    %1101 = sbr.rel (0) target = $region25
  $region24: #{_lambda_.4} parent=0 // pred_region
    _
  $region25: #{_lambda_.4} parent=0 // pred_fallthru
    _
  // Predicated region
  $region26: #{_lambda_.4} parent=0 // pred_check
    _
  $region27: #{_lambda_.4} parent=0 // pred_check_branch
    %1103 = sbr.rel (0) target = $region29
  $region28: #{_lambda_.4} parent=0 // pred_region
    _
  $region29: #{_lambda_.4} parent=0 // pred_fallthru
    _
  // Predicated region
  $region30: #{_lambda_.4} parent=0 // pred_check
    _
  $region31: #{_lambda_.4} parent=0 // pred_check_branch
    %1105 = sbr.rel (0) target = $region33
  $region32: #{_lambda_.4} parent=0 // pred_region
    _
  $region33: #{_lambda_.4} parent=0 // pred_fallthru
    _
  // Predicated region
  $region34: #{_lambda_.4} parent=0 // pred_check
    _
  $region35: #{_lambda_.4} parent=0 // pred_check_branch
    %1107 = sbr.rel (0) target = $region37
  $region36: #{_lambda_.4} parent=0 // pred_region
    _
  $region37: #{_lambda_.4} parent=0 // pred_fallthru
    _
  // Predicated region
  $region38: #{_lambda_.4} parent=0 // pred_check
    _
  $region39: #{_lambda_.4} parent=0 // pred_check_branch
    %1109 = sbr.rel (0) target = $region41
  $region40: #{_lambda_.4} parent=0 // pred_region
    _
  $region41: #{_lambda_.4} parent=0 // pred_fallthru
    _

// kernel: _lambda_.7
$region0: #{_lambda_.7}
  #allocation0 [shape = 'u32[]', space=smem, size = 0x4, offset = 0x4, fixed_abs, tag = 'smem constant byte address 0x4 - core index']
  #allocation1 [shape = 'u32[72,128]{1,0:T(1,128)}', space=vmem, size = 0x9000, scoped, tag = 'internal scratch']
  %s0 = inlined_call_operand.vmem [shape: f32[512,128], index: 0, kind: input, shape index: {}]
  %s1 = inlined_call_operand.vmem [shape: f32[512,128], index: 1, kind: input, shape index: {}]
  %s2 = inlined_call_operand.vmem [shape: f32[1,128], index: 2, kind: input, shape index: {}]
  %s3 = inlined_call_operand.vmem [shape: f32[1,128], index: 3, kind: input, shape index: {}]
  %s4 = inlined_call_operand.vmem [shape: f32[512,128], index: 4, kind: output, shape index: {}]
  %s5 = sld [smem:[#allocation0]]
  $region26: #{_lambda_.7} parent=0
    _
  %s7 = ssub.s32 1, %s5
  %s8 = scalar_select 0, %s7, %s5
  // Predicated region
  $region2: #{_lambda_.7} parent=0 // pred_check
    _
  $region3: #{_lambda_.7} parent=0 // pred_check_branch
    %10 = sbr.rel (0) target = $region5
  $region4: #{_lambda_.7} parent=0 // pred_region
    _
  $region5: #{_lambda_.7} parent=0 // pred_fallthru
    _
  // Predicated region
  $region6: #{_lambda_.7} parent=0 // pred_check
    _
  $region7: #{_lambda_.7} parent=0 // pred_check_branch
    %12 = sbr.rel (0) target = $region9
  $region8: #{_lambda_.7} parent=0 // pred_region
    _
  $region9: #{_lambda_.7} parent=0 // pred_fallthru
    _
  // Predicated region
  $region10: #{_lambda_.7} parent=0 // pred_check
    _
  $region11: #{_lambda_.7} parent=0 // pred_check_branch
    %14 = sbr.rel (0) target = $region13
  $region12: #{_lambda_.7} parent=0 // pred_region
    _
  $region13: #{_lambda_.7} parent=0 // pred_fallthru
    _
  // Predicated region
  $region14: #{_lambda_.7} parent=0 // pred_check
    _
  $region15: #{_lambda_.7} parent=0 // pred_check_branch
    %16 = sbr.rel (0) target = $region17
  $region16: #{_lambda_.7} parent=0 // pred_region
    _
  $region17: #{_lambda_.7} parent=0 // pred_fallthru
    _
  %v17 = vld [vmem:[%s0] sm:$0xff]
  %v18 = vld [vmem:[%s0 + $0x8] sm:$0xff]
  %v19 = vld [vmem:[%s0 + $0x10] sm:$0xff]
  %v20 = vld [vmem:[%s0 + $0x18] sm:$0xff]
  %v21 = vld [vmem:[%s0 + $0x20] sm:$0xff]
  %v22 = vld [vmem:[%s0 + $0x28] sm:$0xff]
  %v23 = vld [vmem:[%s0 + $0x30] sm:$0xff]
  %v24 = vld [vmem:[%s0 + $0x38] sm:$0xff]
  %v25 = vld [vmem:[%s0 + $0x40] sm:$0xff]
  %v26 = vld [vmem:[%s0 + $0x48] sm:$0xff]
  %v27 = vld [vmem:[%s0 + $0x50] sm:$0xff]
  %v28 = vld [vmem:[%s0 + $0x58] sm:$0xff]
  %v29 = vld [vmem:[%s0 + $0x60] sm:$0xff]
  %v30 = vld [vmem:[%s0 + $0x68] sm:$0xff]
  %v31 = vld [vmem:[%s0 + $0x70] sm:$0xff]
  %v32 = vld [vmem:[%s0 + $0x78] sm:$0xff]
  %v33 = vld [vmem:[%s0 + $0x80] sm:$0xff]
  %v34 = vld [vmem:[%s0 + $0x88] sm:$0xff]
  %v35 = vld [vmem:[%s0 + $0x90] sm:$0xff]
  %v36 = vld [vmem:[%s0 + $0x98] sm:$0xff]
  %v37 = vld [vmem:[%s0 + $0xa0] sm:$0xff]
  %v38 = vld [vmem:[%s0 + $0xa8] sm:$0xff]
  %v39 = vld [vmem:[%s0 + $0xb0] sm:$0xff]
  %v40 = vld [vmem:[%s0 + $0xb8] sm:$0xff]
  %v41 = vld [vmem:[%s0 + $0xc0] sm:$0xff]
  %v42 = vld [vmem:[%s0 + $0xc8] sm:$0xff]
  %v43 = vld [vmem:[%s0 + $0xd0] sm:$0xff]
  %v44 = vld [vmem:[%s0 + $0xd8] sm:$0xff]
  %v45 = vld [vmem:[%s0 + $0xe0] sm:$0xff]
  %v46 = vld [vmem:[%s0 + $0xe8] sm:$0xff]
  %v47 = vld [vmem:[%s0 + $0xf0] sm:$0xff]
  %v48 = vld [vmem:[%s0 + $0xf8] sm:$0xff]
  %v49 = vld [vmem:[%s0 + $0x100] sm:$0xff]
  %v50 = vld [vmem:[%s0 + $0x108] sm:$0xff]
  %v51 = vld [vmem:[%s0 + $0x110] sm:$0xff]
  %v52 = vld [vmem:[%s0 + $0x118] sm:$0xff]
  %v53 = vld [vmem:[%s0 + $0x120] sm:$0xff]
  %v54 = vld [vmem:[%s0 + $0x128] sm:$0xff]
  %v55 = vld [vmem:[%s0 + $0x130] sm:$0xff]
  %v56 = vld [vmem:[%s0 + $0x138] sm:$0xff]
  %v57 = vld [vmem:[%s0 + $0x140] sm:$0xff]
  %v58 = vld [vmem:[%s0 + $0x148] sm:$0xff]
  %v59 = vld [vmem:[%s0 + $0x150] sm:$0xff]
  %v60 = vld [vmem:[%s0 + $0x158] sm:$0xff]
  %v61 = vld [vmem:[%s0 + $0x160] sm:$0xff]
  %v62 = vld [vmem:[%s0 + $0x168] sm:$0xff]
  %v63 = vld [vmem:[%s0 + $0x170] sm:$0xff]
  %v64 = vld [vmem:[%s0 + $0x178] sm:$0xff]
  %v65 = vld [vmem:[%s0 + $0x180] sm:$0xff]
  %v66 = vld [vmem:[%s0 + $0x188] sm:$0xff]
  %v67 = vld [vmem:[%s0 + $0x190] sm:$0xff]
  %v68 = vld [vmem:[%s0 + $0x198] sm:$0xff]
  %v69 = vld [vmem:[%s0 + $0x1a0] sm:$0xff]
  %v70 = vld [vmem:[%s0 + $0x1a8] sm:$0xff]
  %v71 = vld [vmem:[%s0 + $0x1b0] sm:$0xff]
  %v72 = vld [vmem:[%s0 + $0x1b8] sm:$0xff]
  %v73 = vld [vmem:[%s0 + $0x1c0] sm:$0xff]
  %v74 = vld [vmem:[%s0 + $0x1c8] sm:$0xff]
  %v75 = vld [vmem:[%s0 + $0x1d0] sm:$0xff]
  %v76 = vld [vmem:[%s0 + $0x1d8] sm:$0xff]
  %v77 = vld [vmem:[%s0 + $0x1e0] sm:$0xff]
  %v78 = vld [vmem:[%s0 + $0x1e8] sm:$0xff]
  %v79 = vld [vmem:[%s0 + $0x1f0] sm:$0xff]
  %v80 = vld [vmem:[%s0 + $0x1f8] sm:$0xff]
  %v81 = vld [vmem:[%s2] sm:$0x1]
  %v83 = vperm.slane %v81, 0
  %v85 = vmul.f32 %v17, %v83
  %v86 = vmul.f32 %v18, %v83
  %v87 = vmul.f32 %v19, %v83
  %v88 = vmul.f32 %v20, %v83
  %v89 = vmul.f32 %v21, %v83
  %v90 = vmul.f32 %v22, %v83
  %v91 = vmul.f32 %v23, %v83
  %v92 = vmul.f32 %v24, %v83
  %v93 = vmul.f32 %v25, %v83
  %v94 = vmul.f32 %v26, %v83
  %v95 = vmul.f32 %v27, %v83
  %v96 = vmul.f32 %v28, %v83
  %v97 = vmul.f32 %v29, %v83
  %v98 = vmul.f32 %v30, %v83
  %v99 = vmul.f32 %v31, %v83
  %v100 = vmul.f32 %v32, %v83
  %v101 = vmul.f32 %v33, %v83
  %v102 = vmul.f32 %v34, %v83
  %v103 = vmul.f32 %v35, %v83
  %v104 = vmul.f32 %v36, %v83
  %v105 = vmul.f32 %v37, %v83
  %v106 = vmul.f32 %v38, %v83
  %v107 = vmul.f32 %v39, %v83
  %v108 = vmul.f32 %v40, %v83
  %v109 = vmul.f32 %v41, %v83
  %v110 = vmul.f32 %v42, %v83
  %v111 = vmul.f32 %v43, %v83
  %v112 = vmul.f32 %v44, %v83
  %v113 = vmul.f32 %v45, %v83
  %v114 = vmul.f32 %v46, %v83
  %v115 = vmul.f32 %v47, %v83
  %v116 = vmul.f32 %v48, %v83
  %v117 = vmul.f32 %v49, %v83
  %v118 = vmul.f32 %v50, %v83
  %v119 = vmul.f32 %v51, %v83
  %v120 = vmul.f32 %v52, %v83
  %v121 = vmul.f32 %v53, %v83
  %v122 = vmul.f32 %v54, %v83
  %v123 = vmul.f32 %v55, %v83
  %v124 = vmul.f32 %v56, %v83
  %v125 = vmul.f32 %v57, %v83
  %v126 = vmul.f32 %v58, %v83
  %v127 = vmul.f32 %v59, %v83
  %v128 = vmul.f32 %v60, %v83
  %v129 = vmul.f32 %v61, %v83
  %v130 = vmul.f32 %v62, %v83
  %v131 = vmul.f32 %v63, %v83
  %v132 = vmul.f32 %v64, %v83
  %v133 = vmul.f32 %v65, %v83
  %v134 = vmul.f32 %v66, %v83
  %v135 = vmul.f32 %v67, %v83
  %v136 = vmul.f32 %v68, %v83
  %v137 = vmul.f32 %v69, %v83
  %v138 = vmul.f32 %v70, %v83
  %v139 = vmul.f32 %v71, %v83
  %v140 = vmul.f32 %v72, %v83
  %v141 = vmul.f32 %v73, %v83
  %v142 = vmul.f32 %v74, %v83
  %v143 = vmul.f32 %v75, %v83
  %v144 = vmul.f32 %v76, %v83
  %v145 = vmul.f32 %v77, %v83
  %v146 = vmul.f32 %v78, %v83
  %v147 = vmul.f32 %v79, %v83
  %v148 = vmul.f32 %v80, %v83
  %v149 = vld [vmem:[%s3] sm:$0x1]
  %v151 = vperm.slane %v149, 0
  %v153 = vadd.f32 %v85, %v151
  %v154 = vadd.f32 %v86, %v151
  %v155 = vadd.f32 %v87, %v151
  %v156 = vadd.f32 %v88, %v151
  %v157 = vadd.f32 %v89, %v151
  %v158 = vadd.f32 %v90, %v151
  %v159 = vadd.f32 %v91, %v151
  %v160 = vadd.f32 %v92, %v151
  %v161 = vadd.f32 %v93, %v151
  %v162 = vadd.f32 %v94, %v151
  %v163 = vadd.f32 %v95, %v151
  %v164 = vadd.f32 %v96, %v151
  %v165 = vadd.f32 %v97, %v151
  %v166 = vadd.f32 %v98, %v151
  %v167 = vadd.f32 %v99, %v151
  %v168 = vadd.f32 %v100, %v151
  %v169 = vadd.f32 %v101, %v151
  %v170 = vadd.f32 %v102, %v151
  %v171 = vadd.f32 %v103, %v151
  %v172 = vadd.f32 %v104, %v151
  %v173 = vadd.f32 %v105, %v151
  %v174 = vadd.f32 %v106, %v151
  %v175 = vadd.f32 %v107, %v151
  %v176 = vadd.f32 %v108, %v151
  %v177 = vadd.f32 %v109, %v151
  %v178 = vadd.f32 %v110, %v151
  %v179 = vadd.f32 %v111, %v151
  %v180 = vadd.f32 %v112, %v151
  %v181 = vadd.f32 %v113, %v151
  %v182 = vadd.f32 %v114, %v151
  %v183 = vadd.f32 %v115, %v151
  %v184 = vadd.f32 %v116, %v151
  %v185 = vadd.f32 %v117, %v151
  %v186 = vadd.f32 %v118, %v151
  %v187 = vadd.f32 %v119, %v151
  %v188 = vadd.f32 %v120, %v151
  %v189 = vadd.f32 %v121, %v151
  %v190 = vadd.f32 %v122, %v151
  %v191 = vadd.f32 %v123, %v151
  %v192 = vadd.f32 %v124, %v151
  %v193 = vadd.f32 %v125, %v151
  %v194 = vadd.f32 %v126, %v151
  %v195 = vadd.f32 %v127, %v151
  %v196 = vadd.f32 %v128, %v151
  %v197 = vadd.f32 %v129, %v151
  %v198 = vadd.f32 %v130, %v151
  %v199 = vadd.f32 %v131, %v151
  %v200 = vadd.f32 %v132, %v151
  %v201 = vadd.f32 %v133, %v151
  %v202 = vadd.f32 %v134, %v151
  %v203 = vadd.f32 %v135, %v151
  %v204 = vadd.f32 %v136, %v151
  %v205 = vadd.f32 %v137, %v151
  %v206 = vadd.f32 %v138, %v151
  %v207 = vadd.f32 %v139, %v151
  %v208 = vadd.f32 %v140, %v151
  %v209 = vadd.f32 %v141, %v151
  %v210 = vadd.f32 %v142, %v151
  %v211 = vadd.f32 %v143, %v151
  %v212 = vadd.f32 %v144, %v151
  %v213 = vadd.f32 %v145, %v151
  %v214 = vadd.f32 %v146, %v151
  %v215 = vadd.f32 %v147, %v151
  %v216 = vadd.f32 %v148, %v151
  %v217 = vld [vmem:[%s1] sm:$0xff]
  %v218 = vld [vmem:[%s1 + $0x8] sm:$0xff]
  %v219 = vld [vmem:[%s1 + $0x10] sm:$0xff]
  %v220 = vld [vmem:[%s1 + $0x18] sm:$0xff]
  %v221 = vld [vmem:[%s1 + $0x20] sm:$0xff]
  %v222 = vld [vmem:[%s1 + $0x28] sm:$0xff]
  %v223 = vld [vmem:[%s1 + $0x30] sm:$0xff]
  %v224 = vld [vmem:[%s1 + $0x38] sm:$0xff]
  %v225 = vld [vmem:[%s1 + $0x40] sm:$0xff]
  %v226 = vld [vmem:[%s1 + $0x48] sm:$0xff]
  %v227 = vld [vmem:[%s1 + $0x50] sm:$0xff]
  %v228 = vld [vmem:[%s1 + $0x58] sm:$0xff]
  %v229 = vld [vmem:[%s1 + $0x60] sm:$0xff]
  %v230 = vld [vmem:[%s1 + $0x68] sm:$0xff]
  %v231 = vld [vmem:[%s1 + $0x70] sm:$0xff]
  %v232 = vld [vmem:[%s1 + $0x78] sm:$0xff]
  %v233 = vld [vmem:[%s1 + $0x80] sm:$0xff]
  %v234 = vld [vmem:[%s1 + $0x88] sm:$0xff]
  %v235 = vld [vmem:[%s1 + $0x90] sm:$0xff]
  %v236 = vld [vmem:[%s1 + $0x98] sm:$0xff]
  %v237 = vld [vmem:[%s1 + $0xa0] sm:$0xff]
  %v238 = vld [vmem:[%s1 + $0xa8] sm:$0xff]
  %v239 = vld [vmem:[%s1 + $0xb0] sm:$0xff]
  %v240 = vld [vmem:[%s1 + $0xb8] sm:$0xff]
  %v241 = vld [vmem:[%s1 + $0xc0] sm:$0xff]
  %v242 = vld [vmem:[%s1 + $0xc8] sm:$0xff]
  %v243 = vld [vmem:[%s1 + $0xd0] sm:$0xff]
  %v244 = vld [vmem:[%s1 + $0xd8] sm:$0xff]
  %v245 = vld [vmem:[%s1 + $0xe0] sm:$0xff]
  %v246 = vld [vmem:[%s1 + $0xe8] sm:$0xff]
  %v247 = vld [vmem:[%s1 + $0xf0] sm:$0xff]
  %v248 = vld [vmem:[%s1 + $0xf8] sm:$0xff]
  %v249 = vld [vmem:[%s1 + $0x100] sm:$0xff]
  %v250 = vld [vmem:[%s1 + $0x108] sm:$0xff]
  %v251 = vld [vmem:[%s1 + $0x110] sm:$0xff]
  %v252 = vld [vmem:[%s1 + $0x118] sm:$0xff]
  %v253 = vld [vmem:[%s1 + $0x120] sm:$0xff]
  %v254 = vld [vmem:[%s1 + $0x128] sm:$0xff]
  %v255 = vld [vmem:[%s1 + $0x130] sm:$0xff]
  %v256 = vld [vmem:[%s1 + $0x138] sm:$0xff]
  %v257 = vld [vmem:[%s1 + $0x140] sm:$0xff]
  %v258 = vld [vmem:[%s1 + $0x148] sm:$0xff]
  %v259 = vld [vmem:[%s1 + $0x150] sm:$0xff]
  %v260 = vld [vmem:[%s1 + $0x158] sm:$0xff]
  %v261 = vld [vmem:[%s1 + $0x160] sm:$0xff]
  %v262 = vld [vmem:[%s1 + $0x168] sm:$0xff]
  %v263 = vld [vmem:[%s1 + $0x170] sm:$0xff]
  %v264 = vld [vmem:[%s1 + $0x178] sm:$0xff]
  %v265 = vld [vmem:[%s1 + $0x180] sm:$0xff]
  %v266 = vld [vmem:[%s1 + $0x188] sm:$0xff]
  %v267 = vld [vmem:[%s1 + $0x190] sm:$0xff]
  %v268 = vld [vmem:[%s1 + $0x198] sm:$0xff]
  %v269 = vld [vmem:[%s1 + $0x1a0] sm:$0xff]
  %v270 = vld [vmem:[%s1 + $0x1a8] sm:$0xff]
  %v271 = vld [vmem:[%s1 + $0x1b0] sm:$0xff]
  %v272 = vld [vmem:[%s1 + $0x1b8] sm:$0xff]
  %v273 = vld [vmem:[%s1 + $0x1c0] sm:$0xff]
  %v274 = vld [vmem:[%s1 + $0x1c8] sm:$0xff]
  %v275 = vld [vmem:[%s1 + $0x1d0] sm:$0xff]
  %v276 = vld [vmem:[%s1 + $0x1d8] sm:$0xff]
  %v277 = vld [vmem:[%s1 + $0x1e0] sm:$0xff]
  %v278 = vld [vmem:[%s1 + $0x1e8] sm:$0xff]
  %v279 = vld [vmem:[%s1 + $0x1f0] sm:$0xff]
  %v280 = vld [vmem:[%s1 + $0x1f8] sm:$0xff]
  %v281 = vadd.f32 %v153, %v217
  %v282 = vadd.f32 %v154, %v218
  %v283 = vadd.f32 %v155, %v219
  %v284 = vadd.f32 %v156, %v220
  %v285 = vadd.f32 %v157, %v221
  %v286 = vadd.f32 %v158, %v222
  %v287 = vadd.f32 %v159, %v223
  %v288 = vadd.f32 %v160, %v224
  %v289 = vadd.f32 %v161, %v225
  %v290 = vadd.f32 %v162, %v226
  %v291 = vadd.f32 %v163, %v227
  %v292 = vadd.f32 %v164, %v228
  %v293 = vadd.f32 %v165, %v229
  %v294 = vadd.f32 %v166, %v230
  %v295 = vadd.f32 %v167, %v231
  %v296 = vadd.f32 %v168, %v232
  %v297 = vadd.f32 %v169, %v233
  %v298 = vadd.f32 %v170, %v234
  %v299 = vadd.f32 %v171, %v235
  %v300 = vadd.f32 %v172, %v236
  %v301 = vadd.f32 %v173, %v237
  %v302 = vadd.f32 %v174, %v238
  %v303 = vadd.f32 %v175, %v239
  %v304 = vadd.f32 %v176, %v240
  %v305 = vadd.f32 %v177, %v241
  %v306 = vadd.f32 %v178, %v242
  %v307 = vadd.f32 %v179, %v243
  %v308 = vadd.f32 %v180, %v244
  %v309 = vadd.f32 %v181, %v245
  %v310 = vadd.f32 %v182, %v246
  %v311 = vadd.f32 %v183, %v247
  %v312 = vadd.f32 %v184, %v248
  %v313 = vadd.f32 %v185, %v249
  %v314 = vadd.f32 %v186, %v250
  %v315 = vadd.f32 %v187, %v251
  %v316 = vadd.f32 %v188, %v252
  %v317 = vadd.f32 %v189, %v253
  %v318 = vadd.f32 %v190, %v254
  %v319 = vadd.f32 %v191, %v255
  %v320 = vadd.f32 %v192, %v256
  %v321 = vadd.f32 %v193, %v257
  %v322 = vadd.f32 %v194, %v258
  %v323 = vadd.f32 %v195, %v259
  %v324 = vadd.f32 %v196, %v260
  %v325 = vadd.f32 %v197, %v261
  %v326 = vadd.f32 %v198, %v262
  %v327 = vadd.f32 %v199, %v263
  %v328 = vadd.f32 %v200, %v264
  %v329 = vadd.f32 %v201, %v265
  %v330 = vadd.f32 %v202, %v266
  %v331 = vadd.f32 %v203, %v267
  %v332 = vadd.f32 %v204, %v268
  %v333 = vadd.f32 %v205, %v269
  %v334 = vadd.f32 %v206, %v270
  %v335 = vadd.f32 %v207, %v271
  %v336 = vadd.f32 %v208, %v272
  %v337 = vadd.f32 %v209, %v273
  %v338 = vadd.f32 %v210, %v274
  %v339 = vadd.f32 %v211, %v275
  %v340 = vadd.f32 %v212, %v276
  %v341 = vadd.f32 %v213, %v277
  %v342 = vadd.f32 %v214, %v278
  %v343 = vadd.f32 %v215, %v279
  %v344 = vadd.f32 %v216, %v280
  %v345 = vmax.f32 %v281, 0.0
  %v346 = vmax.f32 %v282, 0.0
  %v347 = vmax.f32 %v283, 0.0
  %v348 = vmax.f32 %v284, 0.0
  %v349 = vmax.f32 %v285, 0.0
  %v350 = vmax.f32 %v286, 0.0
  %v351 = vmax.f32 %v287, 0.0
  %v352 = vmax.f32 %v288, 0.0
  %v353 = vmax.f32 %v289, 0.0
  %v354 = vmax.f32 %v290, 0.0
  %v355 = vmax.f32 %v291, 0.0
  %v356 = vmax.f32 %v292, 0.0
  %v357 = vmax.f32 %v293, 0.0
  %v358 = vmax.f32 %v294, 0.0
  %v359 = vmax.f32 %v295, 0.0
  %v360 = vmax.f32 %v296, 0.0
  %v361 = vmax.f32 %v297, 0.0
  %v362 = vmax.f32 %v298, 0.0
  %v363 = vmax.f32 %v299, 0.0
  %v364 = vmax.f32 %v300, 0.0
  %v365 = vmax.f32 %v301, 0.0
  %v366 = vmax.f32 %v302, 0.0
  %v367 = vmax.f32 %v303, 0.0
  %v368 = vmax.f32 %v304, 0.0
  %v369 = vmax.f32 %v305, 0.0
  %v370 = vmax.f32 %v306, 0.0
  %v371 = vmax.f32 %v307, 0.0
  %v372 = vmax.f32 %v308, 0.0
  %v373 = vmax.f32 %v309, 0.0
  %v374 = vmax.f32 %v310, 0.0
  %v375 = vmax.f32 %v311, 0.0
  %v376 = vmax.f32 %v312, 0.0
  %v377 = vmax.f32 %v313, 0.0
  %v378 = vmax.f32 %v314, 0.0
  %v379 = vmax.f32 %v315, 0.0
  %v380 = vmax.f32 %v316, 0.0
  %v381 = vmax.f32 %v317, 0.0
  %v382 = vmax.f32 %v318, 0.0
  %v383 = vmax.f32 %v319, 0.0
  %v384 = vmax.f32 %v320, 0.0
  %v385 = vmax.f32 %v321, 0.0
  %v386 = vmax.f32 %v322, 0.0
  %v387 = vmax.f32 %v323, 0.0
  %v388 = vmax.f32 %v324, 0.0
  %v389 = vmax.f32 %v325, 0.0
  %v390 = vmax.f32 %v326, 0.0
  %v391 = vmax.f32 %v327, 0.0
  %v392 = vmax.f32 %v328, 0.0
  %v393 = vmax.f32 %v329, 0.0
  %v394 = vmax.f32 %v330, 0.0
  %v395 = vmax.f32 %v331, 0.0
  %v396 = vmax.f32 %v332, 0.0
  %v397 = vmax.f32 %v333, 0.0
  %v398 = vmax.f32 %v334, 0.0
  %v399 = vmax.f32 %v335, 0.0
  %v400 = vmax.f32 %v336, 0.0
  %v401 = vmax.f32 %v337, 0.0
  %v402 = vmax.f32 %v338, 0.0
  %v403 = vmax.f32 %v339, 0.0
  %v404 = vmax.f32 %v340, 0.0
  %v405 = vmax.f32 %v341, 0.0
  %v406 = vmax.f32 %v342, 0.0
  %v407 = vmax.f32 %v343, 0.0
  %v408 = vmax.f32 %v344, 0.0
  %409 = vst [vmem:[%s4] sm:$0xff] %v345
  %410 = vst [vmem:[%s4 + $0x8] sm:$0xff] %v346
  %411 = vst [vmem:[%s4 + $0x10] sm:$0xff] %v347
  %412 = vst [vmem:[%s4 + $0x18] sm:$0xff] %v348
  %413 = vst [vmem:[%s4 + $0x20] sm:$0xff] %v349
  %414 = vst [vmem:[%s4 + $0x28] sm:$0xff] %v350
  %415 = vst [vmem:[%s4 + $0x30] sm:$0xff] %v351
  %416 = vst [vmem:[%s4 + $0x38] sm:$0xff] %v352
  %417 = vst [vmem:[%s4 + $0x40] sm:$0xff] %v353
  %418 = vst [vmem:[%s4 + $0x48] sm:$0xff] %v354
  %419 = vst [vmem:[%s4 + $0x50] sm:$0xff] %v355
  %420 = vst [vmem:[%s4 + $0x58] sm:$0xff] %v356
  %421 = vst [vmem:[%s4 + $0x60] sm:$0xff] %v357
  %422 = vst [vmem:[%s4 + $0x68] sm:$0xff] %v358
  %423 = vst [vmem:[%s4 + $0x70] sm:$0xff] %v359
  %424 = vst [vmem:[%s4 + $0x78] sm:$0xff] %v360
  %425 = vst [vmem:[%s4 + $0x80] sm:$0xff] %v361
  %426 = vst [vmem:[%s4 + $0x88] sm:$0xff] %v362
  %427 = vst [vmem:[%s4 + $0x90] sm:$0xff] %v363
  %428 = vst [vmem:[%s4 + $0x98] sm:$0xff] %v364
  %429 = vst [vmem:[%s4 + $0xa0] sm:$0xff] %v365
  %430 = vst [vmem:[%s4 + $0xa8] sm:$0xff] %v366
  %431 = vst [vmem:[%s4 + $0xb0] sm:$0xff] %v367
  %432 = vst [vmem:[%s4 + $0xb8] sm:$0xff] %v368
  %433 = vst [vmem:[%s4 + $0xc0] sm:$0xff] %v369
  %434 = vst [vmem:[%s4 + $0xc8] sm:$0xff] %v370
  %435 = vst [vmem:[%s4 + $0xd0] sm:$0xff] %v371
  %436 = vst [vmem:[%s4 + $0xd8] sm:$0xff] %v372
  %437 = vst [vmem:[%s4 + $0xe0] sm:$0xff] %v373
  %438 = vst [vmem:[%s4 + $0xe8] sm:$0xff] %v374
  %439 = vst [vmem:[%s4 + $0xf0] sm:$0xff] %v375
  %440 = vst [vmem:[%s4 + $0xf8] sm:$0xff] %v376
  %441 = vst [vmem:[%s4 + $0x100] sm:$0xff] %v377
  %442 = vst [vmem:[%s4 + $0x108] sm:$0xff] %v378
  %443 = vst [vmem:[%s4 + $0x110] sm:$0xff] %v379
  %444 = vst [vmem:[%s4 + $0x118] sm:$0xff] %v380
  %445 = vst [vmem:[%s4 + $0x120] sm:$0xff] %v381
  %446 = vst [vmem:[%s4 + $0x128] sm:$0xff] %v382
  %447 = vst [vmem:[%s4 + $0x130] sm:$0xff] %v383
  %448 = vst [vmem:[%s4 + $0x138] sm:$0xff] %v384
  %449 = vst [vmem:[%s4 + $0x140] sm:$0xff] %v385
  %450 = vst [vmem:[%s4 + $0x148] sm:$0xff] %v386
  %451 = vst [vmem:[%s4 + $0x150] sm:$0xff] %v387
  %452 = vst [vmem:[%s4 + $0x158] sm:$0xff] %v388
  %453 = vst [vmem:[%s4 + $0x160] sm:$0xff] %v389
  %454 = vst [vmem:[%s4 + $0x168] sm:$0xff] %v390
  %455 = vst [vmem:[%s4 + $0x170] sm:$0xff] %v391
  %456 = vst [vmem:[%s4 + $0x178] sm:$0xff] %v392
  %457 = vst [vmem:[%s4 + $0x180] sm:$0xff] %v393
  %458 = vst [vmem:[%s4 + $0x188] sm:$0xff] %v394
  %459 = vst [vmem:[%s4 + $0x190] sm:$0xff] %v395
  %460 = vst [vmem:[%s4 + $0x198] sm:$0xff] %v396
  %461 = vst [vmem:[%s4 + $0x1a0] sm:$0xff] %v397
  %462 = vst [vmem:[%s4 + $0x1a8] sm:$0xff] %v398
  %463 = vst [vmem:[%s4 + $0x1b0] sm:$0xff] %v399
  %464 = vst [vmem:[%s4 + $0x1b8] sm:$0xff] %v400
  %465 = vst [vmem:[%s4 + $0x1c0] sm:$0xff] %v401
  %466 = vst [vmem:[%s4 + $0x1c8] sm:$0xff] %v402
  %467 = vst [vmem:[%s4 + $0x1d0] sm:$0xff] %v403
  %468 = vst [vmem:[%s4 + $0x1d8] sm:$0xff] %v404
  %469 = vst [vmem:[%s4 + $0x1e0] sm:$0xff] %v405
  %470 = vst [vmem:[%s4 + $0x1e8] sm:$0xff] %v406
  %471 = vst [vmem:[%s4 + $0x1f0] sm:$0xff] %v407
  %472 = vst [vmem:[%s4 + $0x1f8] sm:$0xff] %v408
  // Predicated region
  $region18: #{_lambda_.7} parent=0 // pred_check
    _
  $region19: #{_lambda_.7} parent=0 // pred_check_branch
    %474 = sbr.rel (0) target = $region21
  $region20: #{_lambda_.7} parent=0 // pred_region
    _
  $region21: #{_lambda_.7} parent=0 // pred_fallthru
    _
  // Predicated region
  $region22: #{_lambda_.7} parent=0 // pred_check
    _
  $region23: #{_lambda_.7} parent=0 // pred_check_branch
    %476 = sbr.rel (0) target = $region25
  $region24: #{_lambda_.7} parent=0 // pred_region
    _
  $region25: #{_lambda_.7} parent=0 // pred_fallthru
    _

</llo_original>
